<compile_context>
chip_gen: v6e
topology: v6e:2x2x1
jax: 0.10.0
libtpu: 0.0.40
codegen_flags: <defaults>
</compile_context>

<pallas_src>
import functools
import math

import jax
import jax.numpy as jnp
from jax.experimental import pallas as pl
from jax.experimental.pallas import tpu as pltpu

NEG_INF = -1e9
LN_EPS = 1e-5
VMEM_LIMIT = 64 * 1024 * 1024


# ------------------------------ in-kernel helpers ---------------------------

def _layer_norm(y, g, b, eps):
    mu = jnp.mean(y, axis=-1, keepdims=True)
    yc = y - mu
    var = jnp.mean(yc * yc, axis=-1, keepdims=True)
    return yc * jax.lax.rsqrt(var + eps) * g + b


def _mha_out(q, k, v, wo, bo, bias, nhead):
    """q,k,v: (S*,E) f32 projections (scale folded into q); wo bf16 (E,E); bias f32 (Sq,Sk)."""
    Sq, E = q.shape
    Dh = E // nhead
    qb = q.astype(jnp.bfloat16)
    kb = k.astype(jnp.bfloat16)
    vb = v.astype(jnp.bfloat16)
    ctx_heads = []
    for h in range(nhead):                                           # static unroll
        sl = slice(h * Dh, (h + 1) * Dh)
        # q_h @ k_h^T without materializing the transpose
        s = jax.lax.dot_general(qb[:, sl], kb[:, sl], (((1,), (1,)), ((), ())),
                                preferred_element_type=jnp.float32)  # (Sq, Sk)
        s = s + bias                                                  # mask/pad bias (hoisted)
        s = s - jnp.max(s, axis=-1, keepdims=True)
        p = jnp.exp(s)
        denom = jnp.sum(p, axis=-1, keepdims=True)                    # (Sq, 1)
        ctx = jnp.dot(p.astype(jnp.bfloat16), vb[:, sl],
                      preferred_element_type=jnp.float32)             # (Sq, Dh)
        # normalize AFTER the PV matmul: (Sq,Dh) multiply instead of (Sq,Sk)
        ctx_heads.append(ctx * pl.reciprocal(denom, approx=True))
    ctx_full = jnp.concatenate(ctx_heads, axis=-1)                    # (Sq, E)
    # single full-depth (K=E) out-projection instead of H matmuls with K=Dh
    return jnp.dot(ctx_full.astype(jnp.bfloat16), wo,
                   preferred_element_type=jnp.float32) + bo


# --------------------------------- kernels ----------------------------------

def _self_attn_block_kernel(x_ref, wqkv_ref, wo_ref, par_ref, am_ref, kpm_ref, o_ref,
                            *, nhead, eps):
    # par rows: [bq, bk, bv, bo, ln_g, ln_b]   (6, E)
    x = x_ref[0].astype(jnp.float32)                                  # (Sq, E)
    E = x.shape[-1]
    par = par_ref[...]
    qkv = jnp.dot(x_ref[0].astype(jnp.bfloat16), wqkv_ref[...],
                  preferred_element_type=jnp.float32)                 # (Sq, 3E)
    q = qkv[:, :E] + par[0:1, :]
    k = qkv[:, E:2 * E] + par[1:2, :]
    v = qkv[:, 2 * E:] + par[2:3, :]
    bias = am_ref[...] + kpm_ref[0]                                   # (Sq, Sk)
    attn = _mha_out(q, k, v, wo_ref[...], par[3:4, :], bias, nhead)
    o_ref[0] = _layer_norm(attn + x, par[4:5, :], par[5:6, :], eps).astype(o_ref.dtype)


def _cross_attn_block_kernel(x_ref, mem_ref, wq_ref, wkv_ref, wo_ref, par_ref,
                             am_ref, kpm_ref, o_ref, *, nhead, eps):
    # par rows: [bq, bk, bv, bo, ln_g, ln_b]   (6, E)
    x = x_ref[0].astype(jnp.float32)                                  # (Sq, E)
    E = x.shape[-1]
    par = par_ref[...]
    q = jnp.dot(x_ref[0].astype(jnp.bfloat16), wq_ref[...],
                preferred_element_type=jnp.float32) + par[0:1, :]     # (Sq, E)
    kv = jnp.dot(mem_ref[0].astype(jnp.bfloat16), wkv_ref[...],
                 preferred_element_type=jnp.float32)                  # (Sk, 2E)
    k = kv[:, :E] + par[1:2, :]
    v = kv[:, E:] + par[2:3, :]
    bias = am_ref[...] + kpm_ref[0]                                   # (Sq, Sk)
    attn = _mha_out(q, k, v, wo_ref[...], par[3:4, :], bias, nhead)
    o_ref[0] = _layer_norm(attn + x, par[4:5, :], par[5:6, :], eps).astype(o_ref.dtype)


def _ffn_add_ln_kernel(x_ref, w1_ref, b1_ref, w2_ref, par_ref, o_ref, *, eps, final_ln):
    # par rows: [b2, ln_g, ln_b] (+ [final_g, final_b] when final_ln)
    x_in = x_ref[...]                                                 # (tm, E) bf16
    x = x_in.astype(jnp.float32)
    par = par_ref[...]
    h = jnp.dot(x_in.astype(jnp.bfloat16), w1_ref[...],
                preferred_element_type=jnp.float32) + b1_ref[...]
    h = jnp.maximum(h, 0.0)
    y = jnp.dot(h.astype(jnp.bfloat16), w2_ref[...],
                preferred_element_type=jnp.float32) + par[0:1, :]
    y = _layer_norm(y + x, par[1:2, :], par[2:3, :], eps)
    if final_ln:
        y = _layer_norm(y, par[3:4, :], par[4:5, :], eps)
    o_ref[...] = y.astype(o_ref.dtype)


def _ln_kernel(x_ref, g_ref, b_ref, o_ref, *, eps):
    o_ref[...] = _layer_norm(x_ref[...].astype(jnp.float32),
                             g_ref[...], b_ref[...], eps).astype(o_ref.dtype)


# ------------------------------ pallas wrappers -----------------------------

def _rep(shape):
    """BlockSpec for a weight that is resident (same block) across the grid."""
    return pl.BlockSpec(shape, lambda *_, n=len(shape): (0,) * n)


def pallas_self_attn_block(x, wqkv, wo, par, amask, kpm_add, nhead, out_dtype):
    B, Sq, E = x.shape
    Sk = Sq
    kern = functools.partial(_self_attn_block_kernel, nhead=nhead, eps=LN_EPS)
    return pl.pallas_call(
        kern,
        out_shape=jax.ShapeDtypeStruct((B, Sq, E), out_dtype),
        grid=(B,),
        in_specs=[
            pl.BlockSpec((1, Sq, E), lambda i: (i, 0, 0)),            # x
            _rep((E, 3 * E)),                                         # fused Wqkv^T (bf16, scaled)
            _rep((E, E)),                                             # Wo^T (bf16)
            _rep((6, E)),                                             # packed biases / LN params
            _rep((Sq, Sk)),                                           # additive attention mask
            pl.BlockSpec((1, 1, Sk), lambda i: (i, 0, 0)),            # additive key-padding mask
        ],
        out_specs=pl.BlockSpec((1, Sq, E), lambda i: (i, 0, 0)),
        compiler_params=pltpu.CompilerParams(
            dimension_semantics=("parallel",),
            vmem_limit_bytes=VMEM_LIMIT),
    )(x, wqkv, wo, par, amask, kpm_add)


def pallas_cross_attn_block(x, mem, wq, wkv, wo, par, amask, kpm_add, nhead, out_dtype):
    B, Sq, E = x.shape
    Sk = mem.shape[1]
    kern = functools.partial(_cross_attn_block_kernel, nhead=nhead, eps=LN_EPS)
    return pl.pallas_call(
        kern,
        out_shape=jax.ShapeDtypeStruct((B, Sq, E), out_dtype),
        grid=(B,),
        in_specs=[
            pl.BlockSpec((1, Sq, E), lambda i: (i, 0, 0)),            # x
            pl.BlockSpec((1, Sk, E), lambda i: (i, 0, 0)),            # memory
            _rep((E, E)),                                             # Wq^T (bf16, scaled)
            _rep((E, 2 * E)),                                         # Wkv^T (bf16)
            _rep((E, E)),                                             # Wo^T (bf16)
            _rep((6, E)),                                             # packed biases / LN params
            _rep((Sq, Sk)),                                           # additive attention mask
            pl.BlockSpec((1, 1, Sk), lambda i: (i, 0, 0)),            # additive key-padding mask
        ],
        out_specs=pl.BlockSpec((1, Sq, E), lambda i: (i, 0, 0)),
        compiler_params=pltpu.CompilerParams(
            dimension_semantics=("parallel",),
            vmem_limit_bytes=VMEM_LIMIT),
    )(x, mem, wq, wkv, wo, par, amask, kpm_add)


def pallas_ffn_add_ln(x2d, w1, b1, w2, par, *, final_ln, out_dtype):
    M, E = x2d.shape
    F = w1.shape[1]
    tm = M if M <= 512 else 512
    kern = functools.partial(_ffn_add_ln_kernel, eps=LN_EPS, final_ln=final_ln)
    return pl.pallas_call(
        kern,
        out_shape=jax.ShapeDtypeStruct((M, E), out_dtype),
        grid=(pl.cdiv(M, tm),),
        in_specs=[pl.BlockSpec((tm, E), lambda i: (i, 0)),
                  _rep((E, F)), _rep((1, F)), _rep((F, E)),
                  _rep((par.shape[0], E))],
        out_specs=pl.BlockSpec((tm, E), lambda i: (i, 0)),
        compiler_params=pltpu.CompilerParams(
            dimension_semantics=("parallel",),
            vmem_limit_bytes=VMEM_LIMIT),
    )(x2d, w1, b1, w2, par)


def pallas_layernorm(x2d, g, b):
    """Standalone LN (only used for the degenerate zero-layer case)."""
    M, E = x2d.shape
    tm = M if M <= 512 else 512
    kern = functools.partial(_ln_kernel, eps=LN_EPS)
    return pl.pallas_call(
        kern,
        out_shape=jax.ShapeDtypeStruct((M, E), jnp.float32),
        grid=(pl.cdiv(M, tm),),
        in_specs=[pl.BlockSpec((tm, E), lambda i: (i, 0)), _rep((1, E)), _rep((1, E))],
        out_specs=pl.BlockSpec((tm, E), lambda i: (i, 0)),
        compiler_params=pltpu.CompilerParams(dimension_semantics=("parallel",)),
    )(x2d, g, b)


# ------------------------- decoder forward (Pallas) -------------------------

def _kpm_to_additive(kpm, B, S):
    if kpm is None:
        return jnp.zeros((B, 1, S), jnp.float32)
    return jnp.where(kpm, NEG_INF, 0.0).astype(jnp.float32).reshape(B, 1, S)


def prepare_layer_params(p, E, nhead, *, is_last=False, final_norm_p=None):
    """One-time prep: transpose weights, fuse QKV, fold 1/sqrt(Dh) into Wq/bq, cast matmul
    weights to bf16, and pack small bias/LN params into one (k, E) array per kernel."""
    Dh = E // nhead
    scale = 1.0 / math.sqrt(Dh)
    bf = lambda a: a.astype(jnp.bfloat16)
    out = {}

    # --- self-attention: fused QKV with scale folded into the Q part ---
    sa_w, sa_b = p["sa_in_w"], p["sa_in_b"]                       # (3E,E), (3E,)
    wq_scaled = sa_w[:E] * scale
    out["sa_wqkv"] = bf(jnp.concatenate([wq_scaled, sa_w[E:]], axis=0).T)   # (E, 3E)
    out["sa_wo"] = bf(p["sa_out_w"].T)                            # (E, E)
    out["sa_par"] = jnp.stack([sa_b[:E] * scale, sa_b[E:2 * E], sa_b[2 * E:],
                               p["sa_out_b"], p["ln1_g"], p["ln1_b"]], axis=0)  # (6, E)

    # --- cross-attention: Q separate (tgt), KV fused (memory) ---
    ca_w, ca_b = p["ca_in_w"], p["ca_in_b"]
    out["ca_wq"] = bf((ca_w[:E] * scale).T)                       # (E, E)
    out["ca_wkv"] = bf(ca_w[E:].T)                                # (E, 2E)
    out["ca_wo"] = bf(p["ca_out_w"].T)                            # (E, E)
    out["ca_par"] = jnp.stack([ca_b[:E] * scale, ca_b[E:2 * E], ca_b[2 * E:],
                               p["ca_out_b"], p["ln2_g"], p["ln2_b"]], axis=0)  # (6, E)

    # --- FFN (final decoder norm fused into the last layer's FFN kernel) ---
    out["w1"] = bf(p["w1"].T)                                     # (E, F)
    out["b1"] = p["b1"].reshape(1, -1)                            # (1, F)
    out["w2"] = bf(p["w2"].T)                                     # (F, E)
    ffn_rows = [p["b2"], p["ln3_g"], p["ln3_b"]]
    fuse_final = bool(is_last and final_norm_p is not None)
    if fuse_final:
        ffn_rows += [final_norm_p["g"], final_norm_p["b"]]
    out["ffn_par"] = jnp.stack(ffn_rows, axis=0)                  # (3 or 5, E)
    out["ffn_final_ln"] = fuse_final
    return out


def decoder_layer_pallas(x, mem, pp, nhead, am_self, kpm_self, am_cross, kpm_mem, *, last):
    B, Sq, E = x.shape
    # 1) fused self-attention block (+ add & norm)
    x = pallas_self_attn_block(x, pp["sa_wqkv"], pp["sa_wo"], pp["sa_par"],
                               am_self, kpm_self, nhead, jnp.bfloat16)
    # 2) fused cross-attention block (+ add & norm)
    x = pallas_cross_attn_block(x, mem, pp["ca_wq"], pp["ca_wkv"], pp["ca_wo"], pp["ca_par"],
                                am_cross, kpm_mem, nhead, jnp.bfloat16)
    # 3) fused feed-forward block (+ add & norm [+ fused final decoder norm]), token-tiled
    out_dtype = jnp.float32 if last else jnp.bfloat16
    y = pallas_ffn_add_ln(x.reshape(B * Sq, E), pp["w1"], pp["b1"], pp["w2"], pp["ffn_par"],
                          final_ln=pp["ffn_final_ln"], out_dtype=out_dtype)
    return y.reshape(B, Sq, E)


def transformer_decoder_pallas(tgt, memory, prepared_layers, final_norm_p, nhead,
                               tgt_mask=None, memory_mask=None,
                               tgt_kpm=None, memory_kpm=None):
    S, B, E = tgt.shape
    Sm = memory.shape[0]
    # one-time layout change to batch-first + bf16 residual stream; undone at the end
    x = jnp.transpose(tgt, (1, 0, 2)).astype(jnp.bfloat16)        # (B, S, E)
    mem = jnp.transpose(memory, (1, 0, 2)).astype(jnp.bfloat16)   # (B, Sm, E)
    # additive masks built ONCE per forward, shared by all layers
    am_self = (jnp.zeros((S, S), jnp.float32) if tgt_mask is None
               else tgt_mask.astype(jnp.float32))
    am_cross = (jnp.zeros((S, Sm), jnp.float32) if memory_mask is None
                else memory_mask.astype(jnp.float32))
    kpm_self = _kpm_to_additive(tgt_kpm, B, S)
    kpm_mem = _kpm_to_additive(memory_kpm, B, Sm)

    n = len(prepared_layers)
    for li, pp in enumerate(prepared_layers):
        x = decoder_layer_pallas(x, mem, pp, nhead, am_self, kpm_self, am_cross, kpm_mem,
                                 last=(li == n - 1))

    if n == 0 and final_norm_p is not None:   # degenerate case: norm only
        x = pallas_layernorm(x.astype(jnp.float32).reshape(B * S, E),
                             final_norm_p["g"].reshape(1, E),
                             final_norm_p["b"].reshape(1, E)).reshape(B, S, E)
    return jnp.transpose(x.astype(jnp.float32), (1, 0, 2))


# ------------------------ pure-JAX reference (checking) ---------------------

def _ref_ln(x, g, b):
    mu = x.mean(-1, keepdims=True)
    var = ((x - mu) ** 2).mean(-1, keepdims=True)
    return (x - mu) / jnp.sqrt(var + LN_EPS) * g + b


def _ref_bias(B, H, Sq, Sk, attn_mask, kpm):
    bias = jnp.zeros((B, H, Sq, Sk), jnp.float32)
    if attn_mask is not None:
        bias = bias + attn_mask[None, None, :, :]
    if kpm is not None:
        bias = jnp.where(kpm[:, None, None, :], NEG_INF, bias)
    return bias.reshape(B * H, Sq, Sk)


def _ref_mha(query, key, value, in_w, in_b, out_w, out_b, nhead, attn_mask, kpm):
    Sq, B, E = query.shape
    Sk = key.shape[0]
    Dh = E // nhead
    q = query @ in_w[:E].T + in_b[:E]
    k = key @ in_w[E:2 * E].T + in_b[E:2 * E]
    v = value @ in_w[2 * E:].T + in_b[2 * E:]
    qh = jnp.transpose(q.reshape(Sq, B * nhead, Dh), (1, 0, 2))
    kh = jnp.transpose(k.reshape(Sk, B * nhead, Dh), (1, 0, 2))
    vh = jnp.transpose(v.reshape(Sk, B * nhead, Dh), (1, 0, 2))
    bias = _ref_bias(B, nhead, Sq, Sk, attn_mask, kpm)
    s = jnp.einsum("bqd,bkd->bqk", qh, kh) / math.sqrt(Dh) + bias
    p = jax.nn.softmax(s, axis=-1)
    ctx = jnp.einsum("bqk,bkd->bqd", p, vh)
    ctx = jnp.transpose(ctx, (1, 0, 2)).reshape(Sq, B, E)
    return ctx @ out_w.T + out_b


def transformer_decoder_ref(tgt, memory, layer_params, final_norm, nhead,
                            tgt_mask=None, memory_mask=None,
                            tgt_kpm=None, memory_kpm=None):
    x = tgt
    for p in layer_params:
        sa = _ref_mha(x, x, x, p["sa_in_w"], p["sa_in_b"],
                      p["sa_out_w"], p["sa_out_b"], nhead, tgt_mask, tgt_kpm)
        x = _ref_ln(x + sa, p["ln1_g"], p["ln1_b"])
        ca = _ref_mha(x, memory, memory, p["ca_in_w"], p["ca_in_b"],
                      p["ca_out_w"], p["ca_out_b"], nhead, memory_mask, memory_kpm)
        x = _ref_ln(x + ca, p["ln2_g"], p["ln2_b"])
        h = jnp.maximum(x @ p["w1"].T + p["b1"], 0.0)
        ff = h @ p["w2"].T + p["b2"]
        x = _ref_ln(x + ff, p["ln3_g"], p["ln3_b"])
    if final_norm is not None:
        x = _ref_ln(x, final_norm["g"], final_norm["b"])
    return x


# ------------------------------ parameter init ------------------------------

def init_layer_params(key, E, dff):
    ks = jax.random.split(key, 10)
    w = lambda k, s: (jax.random.normal(k, s, jnp.float32) * 0.05)
    b = lambda k, s: (jax.random.normal(k, s, jnp.float32) * 0.02)
    return dict(
        sa_in_w=w(ks[0], (3 * E, E)), sa_in_b=b(ks[1], (3 * E,)),
        sa_out_w=w(ks[2], (E, E)),    sa_out_b=b(ks[3], (E,)),
        ca_in_w=w(ks[4], (3 * E, E)), ca_in_b=b(ks[5], (3 * E,)),
        ca_out_w=w(ks[6], (E, E)),    ca_out_b=b(ks[7], (E,)),
        w1=w(ks[8], (dff, E)), b1=jnp.zeros((dff,), jnp.float32),
        w2=w(ks[9], (E, dff)), b2=jnp.zeros((E,), jnp.float32),
        ln1_g=jnp.ones((E,), jnp.float32), ln1_b=jnp.zeros((E,), jnp.float32),
        ln2_g=jnp.ones((E,), jnp.float32), ln2_b=jnp.zeros((E,), jnp.float32),
        ln3_g=jnp.ones((E,), jnp.float32), ln3_b=jnp.zeros((E,), jnp.float32),
    )


# ----------------------------------- main ------------------------------------

if __name__ == "__main__":
    S_TGT, S_MEM, B, E, H, DFF, L = 8, 8, 2, 32, 4, 64, 2

    root = jax.random.PRNGKey(0)
    k_tgt, k_mem, k_layers = jax.random.split(root, 3)
    tgt = jax.random.normal(k_tgt, (S_TGT, B, E), jnp.float32)
    memory = jax.random.normal(k_mem, (S_MEM, B, E), jnp.float32)

    layer_keys = jax.random.split(k_layers, L)
    layer_params = [init_layer_params(k, E, DFF) for k in layer_keys]
    final_norm = dict(g=jnp.ones((E,), jnp.float32), b=jnp.zeros((E,), jnp.float32))

    # one-time parameter preparation (fused/pre-scaled weights, packed biases, bf16 casts);
    # the final decoder norm is fused into the last layer's FFN kernel.
    prepared = [prepare_layer_params(p, E, H, is_last=(i == L - 1), final_norm_p=final_norm)
                for i, p in enumerate(layer_params)]

    # causal tgt mask (additive float), memory key padding mask (bool)
    causal = jnp.where(jnp.triu(jnp.ones((S_TGT, S_TGT), jnp.bool_), k=1),
                       NEG_INF, 0.0).astype(jnp.float32)
    mem_kpm = jnp.zeros((B, S_MEM), jnp.bool_).at[1, -2:].set(True)

    out = transformer_decoder_pallas(
        tgt, memory, prepared, final_norm, H,
        tgt_mask=causal, memory_mask=None,
        tgt_kpm=None, memory_kpm=mem_kpm)
    out = jax.block_until_ready(out)

    ref = transformer_decoder_ref(
        tgt, memory, layer_params, final_norm, H,
        tgt_mask=causal, memory_mask=None,
        tgt_kpm=None, memory_kpm=mem_kpm)

    assert out.shape == (S_TGT, B, E)
    # bf16 matmul inputs + bf16 inter-kernel residual stream, f32 softmax/LN math in-kernel
    assert jnp.allclose(out, ref, atol=5e-2, rtol=5e-2), "mismatch vs reference"
    print("KERNEL_OK")
</pallas_src>

<mosaic_0001>
module attributes {stable_mosaic.version = 11 : i64} {
  func.func @_self_attn_block_kernel(%arg0: i32, %arg1: memref<1x8x32xbf16, #tpu.memory_space<vmem>>, %arg2: memref<32x96xbf16, #tpu.memory_space<vmem>>, %arg3: memref<32x32xbf16, #tpu.memory_space<vmem>>, %arg4: memref<6x32xf32, #tpu.memory_space<vmem>>, %arg5: memref<8x8xf32, #tpu.memory_space<vmem>>, %arg6: memref<1x1x8xf32, #tpu.memory_space<vmem>>, %arg7: memref<1x8x32xbf16, #tpu.memory_space<vmem>>) attributes {dimension_semantics = [#tpu.dimension_semantics<parallel>], iteration_bounds = array<i64: 2>, scalar_prefetch = 0 : i64, scratch_operands = 0 : i64, tpu.core_type = #tpu.core_type<tc>, window_params = [{transform_indices = @transform_0, window_bounds = array<i64: 1, 8, 32>}, {pipeline_mode = #tpu.pipeline_mode<synchronous>, transform_indices = @transform_1, window_bounds = array<i64: 32, 96>}, {pipeline_mode = #tpu.pipeline_mode<synchronous>, transform_indices = @transform_2, window_bounds = array<i64: 32, 32>}, {pipeline_mode = #tpu.pipeline_mode<synchronous>, transform_indices = @transform_3, window_bounds = array<i64: 6, 32>}, {pipeline_mode = #tpu.pipeline_mode<synchronous>, transform_indices = @transform_4, window_bounds = array<i64: 8, 8>}, {transform_indices = @transform_5, window_bounds = array<i64: 1, 1, 8>}, {transform_indices = @transform_6, window_bounds = array<i64: 1, 8, 32>}]} {
    %c0 = arith.constant 0 : index
    %c0_0 = arith.constant 0 : index
    %c0_1 = arith.constant 0 : index
    %0 = vector.load %arg1[%c0, %c0_0, %c0_1] : memref<1x8x32xbf16, #tpu.memory_space<vmem>>, vector<1x8x32xbf16>
    %1 = vector.shape_cast %0 : vector<1x8x32xbf16> to vector<8x32xbf16>
    %2 = arith.extf %1 : vector<8x32xbf16> to vector<8x32xf32>
    %c0_2 = arith.constant 0 : index
    %c0_3 = arith.constant 0 : index
    %3 = vector.load %arg4[%c0_2, %c0_3] : memref<6x32xf32, #tpu.memory_space<vmem>>, vector<6x32xf32>
    %c0_4 = arith.constant 0 : index
    %c0_5 = arith.constant 0 : index
    %c0_6 = arith.constant 0 : index
    %4 = vector.load %arg1[%c0_4, %c0_5, %c0_6] : memref<1x8x32xbf16, #tpu.memory_space<vmem>>, vector<1x8x32xbf16>
    %5 = vector.shape_cast %4 : vector<1x8x32xbf16> to vector<8x32xbf16>
    %c0_7 = arith.constant 0 : index
    %c0_8 = arith.constant 0 : index
    %6 = vector.load %arg2[%c0_7, %c0_8] : memref<32x96xbf16, #tpu.memory_space<vmem>>, vector<32x96xbf16>
    %cst = arith.constant dense<0.000000e+00> : vector<8x96xf32>
    %7 = tpu.matmul %5, %6, %cst {dimension_numbers = #tpu.dot_dimension_numbers<[1], [0], [0], [1], [0, 0, 1, 1], [], []>} : vector<8x32xbf16>, vector<32x96xbf16>, vector<8x96xf32> -> vector<8x96xf32>
    %8 = vector.extract_strided_slice %7 {offsets = [0, 0], sizes = [8, 32], strides = [1, 1]} : vector<8x96xf32> to vector<8x32xf32>
    %9 = vector.extract_strided_slice %3 {offsets = [0, 0], sizes = [1, 32], strides = [1, 1]} : vector<6x32xf32> to vector<1x32xf32>
    %10 = vector.broadcast %9 : vector<1x32xf32> to vector<8x32xf32>
    %11 = arith.addf %8, %10 : vector<8x32xf32>
    %12 = vector.extract_strided_slice %7 {offsets = [0, 32], sizes = [8, 32], strides = [1, 1]} : vector<8x96xf32> to vector<8x32xf32>
    %13 = vector.extract_strided_slice %3 {offsets = [1, 0], sizes = [1, 32], strides = [1, 1]} : vector<6x32xf32> to vector<1x32xf32>
    %14 = vector.broadcast %13 : vector<1x32xf32> to vector<8x32xf32>
    %15 = arith.addf %12, %14 : vector<8x32xf32>
    %16 = vector.extract_strided_slice %7 {offsets = [0, 64], sizes = [8, 32], strides = [1, 1]} : vector<8x96xf32> to vector<8x32xf32>
    %17 = vector.extract_strided_slice %3 {offsets = [2, 0], sizes = [1, 32], strides = [1, 1]} : vector<6x32xf32> to vector<1x32xf32>
    %18 = vector.broadcast %17 : vector<1x32xf32> to vector<8x32xf32>
    %19 = arith.addf %16, %18 : vector<8x32xf32>
    %c0_9 = arith.constant 0 : index
    %c0_10 = arith.constant 0 : index
    %20 = vector.load %arg5[%c0_9, %c0_10] : memref<8x8xf32, #tpu.memory_space<vmem>>, vector<8x8xf32>
    %c0_11 = arith.constant 0 : index
    %c0_12 = arith.constant 0 : index
    %c0_13 = arith.constant 0 : index
    %21 = vector.load %arg6[%c0_11, %c0_12, %c0_13] : memref<1x1x8xf32, #tpu.memory_space<vmem>>, vector<1x1x8xf32>
    %22 = vector.shape_cast %21 : vector<1x1x8xf32> to vector<1x8xf32>
    %23 = vector.broadcast %22 : vector<1x8xf32> to vector<8x8xf32>
    %24 = arith.addf %20, %23 : vector<8x8xf32>
    %c0_14 = arith.constant 0 : index
    %c0_15 = arith.constant 0 : index
    %25 = vector.load %arg3[%c0_14, %c0_15] : memref<32x32xbf16, #tpu.memory_space<vmem>>, vector<32x32xbf16>
    %26 = vector.extract_strided_slice %3 {offsets = [3, 0], sizes = [1, 32], strides = [1, 1]} : vector<6x32xf32> to vector<1x32xf32>
    %27 = arith.truncf %11 : vector<8x32xf32> to vector<8x32xbf16>
    %28 = arith.truncf %15 : vector<8x32xf32> to vector<8x32xbf16>
    %29 = arith.truncf %19 : vector<8x32xf32> to vector<8x32xbf16>
    %30 = vector.extract_strided_slice %27 {offsets = [0, 0], sizes = [8, 8], strides = [1, 1]} : vector<8x32xbf16> to vector<8x8xbf16>
    %31 = vector.extract_strided_slice %28 {offsets = [0, 0], sizes = [8, 8], strides = [1, 1]} : vector<8x32xbf16> to vector<8x8xbf16>
    %cst_16 = arith.constant dense<0.000000e+00> : vector<8x8xf32>
    %32 = tpu.matmul %30, %31, %cst_16 {dimension_numbers = #tpu.dot_dimension_numbers<[1], [1], [0], [0], [0, 0, 1, 0], [], []>} : vector<8x8xbf16>, vector<8x8xbf16>, vector<8x8xf32> -> vector<8x8xf32>
    %33 = arith.addf %32, %24 : vector<8x8xf32>
    %cst_17 = arith.constant dense<0xFF800000> : vector<8xf32>
    %34 = vector.multi_reduction <maximumf>, %33, %cst_17 [1] : vector<8x8xf32> to vector<8xf32>
    %35 = vector.shape_cast %34 : vector<8xf32> to vector<8x1xf32>
    %36 = vector.broadcast %35 : vector<8x1xf32> to vector<8x8xf32>
    %37 = arith.subf %33, %36 : vector<8x8xf32>
    %38 = math.exp %37 : vector<8x8xf32>
    %cst_18 = arith.constant dense<0.000000e+00> : vector<8xf32>
    %39 = vector.multi_reduction <add>, %38, %cst_18 [1] : vector<8x8xf32> to vector<8xf32>
    %40 = vector.shape_cast %39 : vector<8xf32> to vector<8x1xf32>
    %41 = arith.truncf %38 : vector<8x8xf32> to vector<8x8xbf16>
    %42 = vector.extract_strided_slice %29 {offsets = [0, 0], sizes = [8, 8], strides = [1, 1]} : vector<8x32xbf16> to vector<8x8xbf16>
    %cst_19 = arith.constant dense<0.000000e+00> : vector<8x8xf32>
    %43 = tpu.matmul %41, %42, %cst_19 {dimension_numbers = #tpu.dot_dimension_numbers<[1], [0], [0], [1], [0, 0, 1, 1], [], []>} : vector<8x8xbf16>, vector<8x8xbf16>, vector<8x8xf32> -> vector<8x8xf32>
    %44 = tpu.reciprocal %40 {approx = true} : vector<8x1xf32> -> vector<8x1xf32>
    %45 = vector.broadcast %44 : vector<8x1xf32> to vector<8x8xf32>
    %46 = arith.mulf %43, %45 : vector<8x8xf32>
    %47 = vector.extract_strided_slice %27 {offsets = [0, 8], sizes = [8, 8], strides = [1, 1]} : vector<8x32xbf16> to vector<8x8xbf16>
    %48 = vector.extract_strided_slice %28 {offsets = [0, 8], sizes = [8, 8], strides = [1, 1]} : vector<8x32xbf16> to vector<8x8xbf16>
    %cst_20 = arith.constant dense<0.000000e+00> : vector<8x8xf32>
    %49 = tpu.matmul %47, %48, %cst_20 {dimension_numbers = #tpu.dot_dimension_numbers<[1], [1], [0], [0], [0, 0, 1, 0], [], []>} : vector<8x8xbf16>, vector<8x8xbf16>, vector<8x8xf32> -> vector<8x8xf32>
    %50 = arith.addf %49, %24 : vector<8x8xf32>
    %cst_21 = arith.constant dense<0xFF800000> : vector<8xf32>
    %51 = vector.multi_reduction <maximumf>, %50, %cst_21 [1] : vector<8x8xf32> to vector<8xf32>
    %52 = vector.shape_cast %51 : vector<8xf32> to vector<8x1xf32>
    %53 = vector.broadcast %52 : vector<8x1xf32> to vector<8x8xf32>
    %54 = arith.subf %50, %53 : vector<8x8xf32>
    %55 = math.exp %54 : vector<8x8xf32>
    %cst_22 = arith.constant dense<0.000000e+00> : vector<8xf32>
    %56 = vector.multi_reduction <add>, %55, %cst_22 [1] : vector<8x8xf32> to vector<8xf32>
    %57 = vector.shape_cast %56 : vector<8xf32> to vector<8x1xf32>
    %58 = arith.truncf %55 : vector<8x8xf32> to vector<8x8xbf16>
    %59 = vector.extract_strided_slice %29 {offsets = [0, 8], sizes = [8, 8], strides = [1, 1]} : vector<8x32xbf16> to vector<8x8xbf16>
    %cst_23 = arith.constant dense<0.000000e+00> : vector<8x8xf32>
    %60 = tpu.matmul %58, %59, %cst_23 {dimension_numbers = #tpu.dot_dimension_numbers<[1], [0], [0], [1], [0, 0, 1, 1], [], []>} : vector<8x8xbf16>, vector<8x8xbf16>, vector<8x8xf32> -> vector<8x8xf32>
    %61 = tpu.reciprocal %57 {approx = true} : vector<8x1xf32> -> vector<8x1xf32>
    %62 = vector.broadcast %61 : vector<8x1xf32> to vector<8x8xf32>
    %63 = arith.mulf %60, %62 : vector<8x8xf32>
    %64 = vector.extract_strided_slice %27 {offsets = [0, 16], sizes = [8, 8], strides = [1, 1]} : vector<8x32xbf16> to vector<8x8xbf16>
    %65 = vector.extract_strided_slice %28 {offsets = [0, 16], sizes = [8, 8], strides = [1, 1]} : vector<8x32xbf16> to vector<8x8xbf16>
    %cst_24 = arith.constant dense<0.000000e+00> : vector<8x8xf32>
    %66 = tpu.matmul %64, %65, %cst_24 {dimension_numbers = #tpu.dot_dimension_numbers<[1], [1], [0], [0], [0, 0, 1, 0], [], []>} : vector<8x8xbf16>, vector<8x8xbf16>, vector<8x8xf32> -> vector<8x8xf32>
    %67 = arith.addf %66, %24 : vector<8x8xf32>
    %cst_25 = arith.constant dense<0xFF800000> : vector<8xf32>
    %68 = vector.multi_reduction <maximumf>, %67, %cst_25 [1] : vector<8x8xf32> to vector<8xf32>
    %69 = vector.shape_cast %68 : vector<8xf32> to vector<8x1xf32>
    %70 = vector.broadcast %69 : vector<8x1xf32> to vector<8x8xf32>
    %71 = arith.subf %67, %70 : vector<8x8xf32>
    %72 = math.exp %71 : vector<8x8xf32>
    %cst_26 = arith.constant dense<0.000000e+00> : vector<8xf32>
    %73 = vector.multi_reduction <add>, %72, %cst_26 [1] : vector<8x8xf32> to vector<8xf32>
    %74 = vector.shape_cast %73 : vector<8xf32> to vector<8x1xf32>
    %75 = arith.truncf %72 : vector<8x8xf32> to vector<8x8xbf16>
    %76 = vector.extract_strided_slice %29 {offsets = [0, 16], sizes = [8, 8], strides = [1, 1]} : vector<8x32xbf16> to vector<8x8xbf16>
    %cst_27 = arith.constant dense<0.000000e+00> : vector<8x8xf32>
    %77 = tpu.matmul %75, %76, %cst_27 {dimension_numbers = #tpu.dot_dimension_numbers<[1], [0], [0], [1], [0, 0, 1, 1], [], []>} : vector<8x8xbf16>, vector<8x8xbf16>, vector<8x8xf32> -> vector<8x8xf32>
    %78 = tpu.reciprocal %74 {approx = true} : vector<8x1xf32> -> vector<8x1xf32>
    %79 = vector.broadcast %78 : vector<8x1xf32> to vector<8x8xf32>
    %80 = arith.mulf %77, %79 : vector<8x8xf32>
    %81 = vector.extract_strided_slice %27 {offsets = [0, 24], sizes = [8, 8], strides = [1, 1]} : vector<8x32xbf16> to vector<8x8xbf16>
    %82 = vector.extract_strided_slice %28 {offsets = [0, 24], sizes = [8, 8], strides = [1, 1]} : vector<8x32xbf16> to vector<8x8xbf16>
    %cst_28 = arith.constant dense<0.000000e+00> : vector<8x8xf32>
    %83 = tpu.matmul %81, %82, %cst_28 {dimension_numbers = #tpu.dot_dimension_numbers<[1], [1], [0], [0], [0, 0, 1, 0], [], []>} : vector<8x8xbf16>, vector<8x8xbf16>, vector<8x8xf32> -> vector<8x8xf32>
    %84 = arith.addf %83, %24 : vector<8x8xf32>
    %cst_29 = arith.constant dense<0xFF800000> : vector<8xf32>
    %85 = vector.multi_reduction <maximumf>, %84, %cst_29 [1] : vector<8x8xf32> to vector<8xf32>
    %86 = vector.shape_cast %85 : vector<8xf32> to vector<8x1xf32>
    %87 = vector.broadcast %86 : vector<8x1xf32> to vector<8x8xf32>
    %88 = arith.subf %84, %87 : vector<8x8xf32>
    %89 = math.exp %88 : vector<8x8xf32>
    %cst_30 = arith.constant dense<0.000000e+00> : vector<8xf32>
    %90 = vector.multi_reduction <add>, %89, %cst_30 [1] : vector<8x8xf32> to vector<8xf32>
    %91 = vector.shape_cast %90 : vector<8xf32> to vector<8x1xf32>
    %92 = arith.truncf %89 : vector<8x8xf32> to vector<8x8xbf16>
    %93 = vector.extract_strided_slice %29 {offsets = [0, 24], sizes = [8, 8], strides = [1, 1]} : vector<8x32xbf16> to vector<8x8xbf16>
    %cst_31 = arith.constant dense<0.000000e+00> : vector<8x8xf32>
    %94 = tpu.matmul %92, %93, %cst_31 {dimension_numbers = #tpu.dot_dimension_numbers<[1], [0], [0], [1], [0, 0, 1, 1], [], []>} : vector<8x8xbf16>, vector<8x8xbf16>, vector<8x8xf32> -> vector<8x8xf32>
    %95 = tpu.reciprocal %91 {approx = true} : vector<8x1xf32> -> vector<8x1xf32>
    %96 = vector.broadcast %95 : vector<8x1xf32> to vector<8x8xf32>
    %97 = arith.mulf %94, %96 : vector<8x8xf32>
    %98 = tpu.concatenate %46, %63, %80, %97 in 1 : vector<8x8xf32>, vector<8x8xf32>, vector<8x8xf32>, vector<8x8xf32> -> vector<8x32xf32>
    %99 = arith.truncf %98 : vector<8x32xf32> to vector<8x32xbf16>
    %cst_32 = arith.constant dense<0.000000e+00> : vector<8x32xf32>
    %100 = tpu.matmul %99, %25, %cst_32 {dimension_numbers = #tpu.dot_dimension_numbers<[1], [0], [0], [1], [0, 0, 1, 1], [], []>} : vector<8x32xbf16>, vector<32x32xbf16>, vector<8x32xf32> -> vector<8x32xf32>
    %101 = vector.broadcast %26 : vector<1x32xf32> to vector<8x32xf32>
    %102 = arith.addf %100, %101 : vector<8x32xf32>
    %103 = arith.addf %102, %2 : vector<8x32xf32>
    %104 = vector.extract_strided_slice %3 {offsets = [4, 0], sizes = [1, 32], strides = [1, 1]} : vector<6x32xf32> to vector<1x32xf32>
    %105 = vector.extract_strided_slice %3 {offsets = [5, 0], sizes = [1, 32], strides = [1, 1]} : vector<6x32xf32> to vector<1x32xf32>
    %cst_33 = arith.constant dense<0.000000e+00> : vector<8xf32>
    %106 = vector.multi_reduction <add>, %103, %cst_33 [1] : vector<8x32xf32> to vector<8xf32>
    %107 = vector.shape_cast %106 : vector<8xf32> to vector<8x1xf32>
    %cst_34 = arith.constant 3.200000e+01 : f32
    %108 = vector.broadcast %cst_34 : f32 to vector<8x1xf32>
    %109 = arith.divf %107, %108 : vector<8x1xf32>
    %110 = vector.broadcast %109 : vector<8x1xf32> to vector<8x32xf32>
    %111 = arith.subf %103, %110 : vector<8x32xf32>
    %112 = arith.mulf %111, %111 : vector<8x32xf32>
    %cst_35 = arith.constant dense<0.000000e+00> : vector<8xf32>
    %113 = vector.multi_reduction <add>, %112, %cst_35 [1] : vector<8x32xf32> to vector<8xf32>
    %114 = vector.shape_cast %113 : vector<8xf32> to vector<8x1xf32>
    %cst_36 = arith.constant 3.200000e+01 : f32
    %115 = vector.broadcast %cst_36 : f32 to vector<8x1xf32>
    %116 = arith.divf %114, %115 : vector<8x1xf32>
    %cst_37 = arith.constant 9.99999974E-6 : f32
    %117 = vector.broadcast %cst_37 : f32 to vector<8x1xf32>
    %118 = arith.addf %116, %117 : vector<8x1xf32>
    %119 = math.rsqrt %118 : vector<8x1xf32>
    %120 = vector.broadcast %119 : vector<8x1xf32> to vector<8x32xf32>
    %121 = arith.mulf %111, %120 : vector<8x32xf32>
    %122 = vector.broadcast %104 : vector<1x32xf32> to vector<8x32xf32>
    %123 = arith.mulf %121, %122 : vector<8x32xf32>
    %124 = vector.broadcast %105 : vector<1x32xf32> to vector<8x32xf32>
    %125 = arith.addf %123, %124 : vector<8x32xf32>
    %126 = arith.truncf %125 : vector<8x32xf32> to vector<8x32xbf16>
    %c0_38 = arith.constant 0 : index
    %c0_39 = arith.constant 0 : index
    %c0_40 = arith.constant 0 : index
    %127 = vector.load %arg7[%c0_38, %c0_39, %c0_40] : memref<1x8x32xbf16, #tpu.memory_space<vmem>>, vector<1x8x32xbf16>
    %128 = vector.shape_cast %127 : vector<1x8x32xbf16> to vector<8x32xbf16>
    %129 = vector.shape_cast %126 : vector<8x32xbf16> to vector<1x8x32xbf16>
    tpu.vector_store %arg7[%c0_38, %c0_39, %c0_40], %129 {strides = array<i32>} : memref<1x8x32xbf16, #tpu.memory_space<vmem>>, vector<1x8x32xbf16>,
    return
  }
  func.func @transform_0(%arg0: i32) -> (i32, i32, i32) {
    %c0_i32 = arith.constant 0 : i32
    %c0_i32_0 = arith.constant 0 : i32
    %c0_i32_1 = arith.constant 0 : i32
    return %arg0, %c0_i32, %c0_i32_0 : i32, i32, i32
  }
  func.func @transform_1(%arg0: i32) -> (i32, i32) {
    %c0_i32 = arith.constant 0 : i32
    %c0_i32_0 = arith.constant 0 : i32
    %c0_i32_1 = arith.constant 0 : i32
    return %c0_i32, %c0_i32_0 : i32, i32
  }
  func.func @transform_2(%arg0: i32) -> (i32, i32) {
    %c0_i32 = arith.constant 0 : i32
    %c0_i32_0 = arith.constant 0 : i32
    %c0_i32_1 = arith.constant 0 : i32
    return %c0_i32, %c0_i32_0 : i32, i32
  }
  func.func @transform_3(%arg0: i32) -> (i32, i32) {
    %c0_i32 = arith.constant 0 : i32
    %c0_i32_0 = arith.constant 0 : i32
    %c0_i32_1 = arith.constant 0 : i32
    return %c0_i32, %c0_i32_0 : i32, i32
  }
  func.func @transform_4(%arg0: i32) -> (i32, i32) {
    %c0_i32 = arith.constant 0 : i32
    %c0_i32_0 = arith.constant 0 : i32
    %c0_i32_1 = arith.constant 0 : i32
    return %c0_i32, %c0_i32_0 : i32, i32
  }
  func.func @transform_5(%arg0: i32) -> (i32, i32, i32) {
    %c0_i32 = arith.constant 0 : i32
    %c0_i32_0 = arith.constant 0 : i32
    %c0_i32_1 = arith.constant 0 : i32
    return %arg0, %c0_i32, %c0_i32_0 : i32, i32, i32
  }
  func.func @transform_6(%arg0: i32) -> (i32, i32, i32) {
    %c0_i32 = arith.constant 0 : i32
    %c0_i32_0 = arith.constant 0 : i32
    %c0_i32_1 = arith.constant 0 : i32
    return %arg0, %c0_i32, %c0_i32_0 : i32, i32, i32
  }
}

</mosaic_0001>

<llo_original>
// kernel: tpu_custom_call.1
$region0: #{tpu_custom_call.1}
  #allocation0 [shape = 'u32[]', space=smem, size = 0x4, offset = 0x4, fixed_abs, tag = 'smem constant byte address 0x4 - core index']
  #allocation1 [shape = 'u32[144,128]{1,0:T(1,128)}', space=vmem, size = 0x12000, scoped, tag = 'internal scratch']
  %s0 = inlined_call_operand.hbm [shape: bf16[2,8,32], index: 0, kind: input, shape index: {}]
  %s1 = inlined_call_operand.hbm [shape: bf16[32,96], index: 1, kind: input, shape index: {}]
  %s2 = inlined_call_operand.hbm [shape: bf16[32,32], index: 2, kind: input, shape index: {}]
  %s3 = inlined_call_operand.hbm [shape: f32[6,32], index: 3, kind: input, shape index: {}]
  %s4 = inlined_call_operand.hbm [shape: f32[8,8], index: 4, kind: input, shape index: {}]
  %s5 = inlined_call_operand.vmem [shape: f32[2,1,8], index: 5, kind: input, shape index: {}]
  %s6 = inlined_call_operand.hbm [shape: bf16[2,8,32], index: 6, kind: output, shape index: {}]
  %s7 = sld [smem:[#allocation0]]
  $region77: #{tpu_custom_call.1} parent=0
    _
  %s9 = ssub.s32 1, %s7
  %s10 = scalar_select 0, %s9, %s7
  $region1: #{tpu_custom_call.1} parent=0
    #allocation2 [shape = 'u8[4096]{0}', space=vmem, size = 0x1000, scoped, tag = 'input window, operand 0']
    #allocation3 [shape = 's32[2]{0}', space=sflag, size = 0x8, scoped, tag = 'scoped memory for tpu_custom_call.1']
    #allocation4 [shape = 's32[2]{0}', space=sflag, size = 0x8, scoped, tag = 'scoped memory for tpu_custom_call.1']
    #allocation5 [shape = 'u8[8192]{0}', space=vmem, size = 0x2000, scoped, tag = 'input window, operand 1, single buffered']
    #allocation6 [shape = 's32[1]{0}', space=sflag, size = 0x4, scoped, tag = 'scoped memory for tpu_custom_call.1']
    #allocation7 [shape = 'u8[8192]{0}', space=vmem, size = 0x2000, scoped, tag = 'input window, operand 2, single buffered']
    #allocation8 [shape = 'u8[4096]{0}', space=vmem, size = 0x1000, scoped, tag = 'input window, operand 3, single buffered']
    #allocation9 [shape = 's32[1]{0}', space=sflag, size = 0x4, scoped, tag = 'scoped memory for tpu_custom_call.1']
    #allocation10 [shape = 'u8[4096]{0}', space=vmem, size = 0x1000, scoped, tag = 'input window, operand 4, single buffered']
    #allocation11 [shape = 'u8[4096]{0}', space=vmem, size = 0x1000, scoped, tag = 'output window, operand 0']
    %11 = vsyncpa [#allocation3], 0
    %s12 = scalar_lea.sflag [#allocation3], 1
    %13 = vsyncpa %s12, 0
    %14 = vsyncpa [#allocation6], 0
    %15 = vsyncpa [#allocation9], 0
    %16 = vsyncpa [#allocation4], 0
    %s17 = scalar_lea.sflag [#allocation4], 1
    %18 = vsyncpa %s17, 0
    loop: start=0, step=1, limit=4
    $region2: #{tpu_custom_call.1} parent=1 // loop_pre_header
      _
    $region3: #{tpu_custom_call.1} parent=1 // loop_header
      %s20 = sphi 0, %s24
      %p21 = scmp.ge.s32.totalorder %s20, 4
      %s30 = sphi 0, %s32
      %s33 = sphi 0, %s30
      %s34 = sphi 0, %s33
      %s50 = sphi 0, %s34
      %s54 = sphi 0, %s54
      %s56 = sphi 0, %s54
      %s57 = sphi 0, %s56
      %s71 = sphi 0, %s57
      %s75 = sphi 0, %s75
      %s77 = sphi 0, %s75
      %s78 = sphi 0, %s77
      %s92 = sphi 0, %s78
      %s96 = sphi 0, %s96
      %s98 = sphi 0, %s96
      %s99 = sphi 0, %s98
      %s113 = sphi 0, %s99
      %s117 = sphi 0, %s117
      %s119 = sphi 0, %s117
      %s120 = sphi 0, %s119
      %s134 = sphi 0, %s120
      %s140 = sphi 0, %s142
      %s143 = sphi 0, %s140
      %s144 = sphi 0, %s143
      %s160 = sphi 0, %s144
      %s166 = sphi 0, %s168
      %s169 = sphi 0, %s166
      %s170 = sphi 0, %s169
      %s186 = sphi 0, %s170
    $region4: #{tpu_custom_call.1} parent=1 // loop_header_branch
      %23 = sbr.rel (%p21) target = $region8
    $region5: #{tpu_custom_call.1} parent=1 // loop_body
      %s25 = ssub.s32 %s20, 1
      %s26 = ssub.s32 %s20, 2
      %s27 = sadd.s32 %s20, 1
      %s28 = ssub.s32 %s20, %s27
      %p29 = scmp.eq.s32.totalorder %s28, 0
      %s31 = sadd.s32 %s30, 1
      %s32 = scalar_select %p29, %s30, %s31
      %p35 = pneg %p29
      %p36 = scmp.eq.s32.totalorder %s20, 1
      %p37 = por %p35, %p36
      %p38 = scmp.ne.s32.totalorder %s30, %s33
      %p39 = scmp.eq.s32.totalorder %s20, 0
      %p40 = por %p38, %p39
      %p41 = scmp.ne.s32.totalorder %s30, %s33
      %p42 = scmp.eq.s32.totalorder %s25, 1
      %p43 = por %p41, %p42
      %p44 = scmp.ne.s32.totalorder %s33, %s34
      %p45 = scmp.eq.s32.totalorder %s25, 0
      %p46 = por %p44, %p45
      %p47 = scmp.ne.s32.totalorder %s33, %s34
      %p48 = scmp.eq.s32.totalorder %s26, 1
      %p49 = por %p47, %p48
      %p51 = scmp.ne.s32.totalorder %s34, %s50
      %p52 = scmp.eq.s32.totalorder %s26, 0
      %p53 = por %p51, %p52
      %s55 = sadd.s32 %s54, 1
      %p58 = scmp.eq.s32.totalorder %s20, 1
      %p59 = scmp.ne.s32.totalorder %s54, %s56
      %p60 = scmp.eq.s32.totalorder %s20, 0
      %p61 = por %p59, %p60
      %p62 = scmp.ne.s32.totalorder %s54, %s56
      %p63 = scmp.eq.s32.totalorder %s25, 1
      %p64 = por %p62, %p63
      %p65 = scmp.ne.s32.totalorder %s56, %s57
      %p66 = scmp.eq.s32.totalorder %s25, 0
      %p67 = por %p65, %p66
      %p68 = scmp.ne.s32.totalorder %s56, %s57
      %p69 = scmp.eq.s32.totalorder %s26, 1
      %p70 = por %p68, %p69
      %p72 = scmp.ne.s32.totalorder %s57, %s71
      %p73 = scmp.eq.s32.totalorder %s26, 0
      %p74 = por %p72, %p73
      %s76 = sadd.s32 %s75, 1
      %p79 = scmp.eq.s32.totalorder %s20, 1
      %p80 = scmp.ne.s32.totalorder %s75, %s77
      %p81 = scmp.eq.s32.totalorder %s20, 0
      %p82 = por %p80, %p81
      %p83 = scmp.ne.s32.totalorder %s75, %s77
      %p84 = scmp.eq.s32.totalorder %s25, 1
      %p85 = por %p83, %p84
      %p86 = scmp.ne.s32.totalorder %s77, %s78
      %p87 = scmp.eq.s32.totalorder %s25, 0
      %p88 = por %p86, %p87
      %p89 = scmp.ne.s32.totalorder %s77, %s78
      %p90 = scmp.eq.s32.totalorder %s26, 1
      %p91 = por %p89, %p90
      %p93 = scmp.ne.s32.totalorder %s78, %s92
      %p94 = scmp.eq.s32.totalorder %s26, 0
      %p95 = por %p93, %p94
      %s97 = sadd.s32 %s96, 1
      %p100 = scmp.eq.s32.totalorder %s20, 1
      %p101 = scmp.ne.s32.totalorder %s96, %s98
      %p102 = scmp.eq.s32.totalorder %s20, 0
      %p103 = por %p101, %p102
      %p104 = scmp.ne.s32.totalorder %s96, %s98
      %p105 = scmp.eq.s32.totalorder %s25, 1
      %p106 = por %p104, %p105
      %p107 = scmp.ne.s32.totalorder %s98, %s99
      %p108 = scmp.eq.s32.totalorder %s25, 0
      %p109 = por %p107, %p108
      %p110 = scmp.ne.s32.totalorder %s98, %s99
      %p111 = scmp.eq.s32.totalorder %s26, 1
      %p112 = por %p110, %p111
      %p114 = scmp.ne.s32.totalorder %s99, %s113
      %p115 = scmp.eq.s32.totalorder %s26, 0
      %p116 = por %p114, %p115
      %s118 = sadd.s32 %s117, 1
      %p121 = scmp.eq.s32.totalorder %s20, 1
      %p122 = scmp.ne.s32.totalorder %s117, %s119
      %p123 = scmp.eq.s32.totalorder %s20, 0
      %p124 = por %p122, %p123
      %p125 = scmp.ne.s32.totalorder %s117, %s119
      %p126 = scmp.eq.s32.totalorder %s25, 1
      %p127 = por %p125, %p126
      %p128 = scmp.ne.s32.totalorder %s119, %s120
      %p129 = scmp.eq.s32.totalorder %s25, 0
      %p130 = por %p128, %p129
      %p131 = scmp.ne.s32.totalorder %s119, %s120
      %p132 = scmp.eq.s32.totalorder %s26, 1
      %p133 = por %p131, %p132
      %p135 = scmp.ne.s32.totalorder %s120, %s134
      %p136 = scmp.eq.s32.totalorder %s26, 0
      %p137 = por %p135, %p136
      %s138 = ssub.s32 %s20, %s27
      %p139 = scmp.eq.s32.totalorder %s138, 0
      %s141 = sadd.s32 %s140, 1
      %s142 = scalar_select %p139, %s140, %s141
      %p145 = pneg %p139
      %p146 = scmp.eq.s32.totalorder %s20, 1
      %p147 = por %p145, %p146
      %p148 = scmp.ne.s32.totalorder %s140, %s143
      %p149 = scmp.eq.s32.totalorder %s20, 0
      %p150 = por %p148, %p149
      %p151 = scmp.ne.s32.totalorder %s140, %s143
      %p152 = scmp.eq.s32.totalorder %s25, 1
      %p153 = por %p151, %p152
      %p154 = scmp.ne.s32.totalorder %s143, %s144
      %p155 = scmp.eq.s32.totalorder %s25, 0
      %p156 = por %p154, %p155
      %p157 = scmp.ne.s32.totalorder %s143, %s144
      %p158 = scmp.eq.s32.totalorder %s26, 1
      %p159 = por %p157, %p158
      %p161 = scmp.ne.s32.totalorder %s144, %s160
      %p162 = scmp.eq.s32.totalorder %s26, 0
      %p163 = por %p161, %p162
      %s164 = ssub.s32 %s20, %s27
      %p165 = scmp.eq.s32.totalorder %s164, 0
      %s167 = sadd.s32 %s166, 1
      %s168 = scalar_select %p165, %s166, %s167
      %p171 = pneg %p165
      %p172 = scmp.eq.s32.totalorder %s20, 1
      %p173 = por %p171, %p172
      %p174 = scmp.ne.s32.totalorder %s166, %s169
      %p175 = scmp.eq.s32.totalorder %s20, 0
      %p176 = por %p174, %p175
      %p177 = scmp.ne.s32.totalorder %s166, %s169
      %p178 = scmp.eq.s32.totalorder %s25, 1
      %p179 = por %p177, %p178
      %p180 = scmp.ne.s32.totalorder %s169, %s170
      %p181 = scmp.eq.s32.totalorder %s25, 0
      %p182 = por %p180, %p181
      %p183 = scmp.ne.s32.totalorder %s169, %s170
      %p184 = scmp.eq.s32.totalorder %s26, 1
      %p185 = por %p183, %p184
      %p187 = scmp.ne.s32.totalorder %s170, %s186
      %p188 = scmp.eq.s32.totalorder %s26, 0
      %p189 = por %p187, %p188
      %p190 = scmp.le.s32.totalorder 1, %s20
      %p191 = scmp.lt.s32.totalorder %s20, 3
      %p192 = pnand %p190, %p191
      %p193 = pneg %p192
      // Predicated region
      $region9: #{tpu_custom_call.1} parent=5 // pred_check
        _
      $region10: #{tpu_custom_call.1} parent=5 // pred_check_branch
        %195 = sbr.rel (%p192) target = $region12
      $region11: #{tpu_custom_call.1} parent=5 // pred_region
        %s196 = ssub.s32 %s20, 1
        // Predicated region
        $region13: #{tpu_custom_call.1} parent=11 // pred_check
          %p197 = pneg %p67
        $region14: #{tpu_custom_call.1} parent=11 // pred_check_branch
          %199 = sbr.rel (%p197) target = $region16
        $region15: #{tpu_custom_call.1} parent=11 // pred_region
          %s201 = ssub.s32 256, 256
          %202 = vsyncadd [#allocation6], %s201
          %s203 = sshll.u32 [#allocation5], 4
          %s204 = int_to_ptr.vmem [resolvable:$true] %s203
          %209 = dma.hbm_to_vmem [thread:$0]  %s1, 256, %s204, [#allocation6], 64, 64, 4
        $region16: #{tpu_custom_call.1} parent=11 // pred_fallthru
          _
        // Predicated region
        $region17: #{tpu_custom_call.1} parent=11 // pred_check
          %p210 = pneg %p88
        $region18: #{tpu_custom_call.1} parent=11 // pred_check_branch
          %212 = sbr.rel (%p210) target = $region20
        $region19: #{tpu_custom_call.1} parent=11 // pred_region
          %s214 = ssub.s32 256, 256
          %215 = vsyncadd [#allocation6], %s214
          %s216 = sshll.u32 [#allocation7], 4
          %s217 = int_to_ptr.vmem [resolvable:$true] %s216
          %222 = dma.hbm_to_vmem [thread:$0]  %s2, 256, %s217, [#allocation6], 64, 64, 4
        $region20: #{tpu_custom_call.1} parent=11 // pred_fallthru
          _
        // Predicated region
        $region21: #{tpu_custom_call.1} parent=11 // pred_check
          %p223 = pneg %p109
        $region22: #{tpu_custom_call.1} parent=11 // pred_check_branch
          %225 = sbr.rel (%p223) target = $region24
        $region23: #{tpu_custom_call.1} parent=11 // pred_region
          %s227 = ssub.s32 128, 128
          %228 = vsyncadd [#allocation9], %s227
          %s230 = sshll.u32 [#allocation8], 4
          %s231 = int_to_ptr.vmem [resolvable:$true] %s230
          %233 = dma.hbm_to_vmem [thread:$0]  %s3, 128, %s231, [#allocation9]
        $region24: #{tpu_custom_call.1} parent=11 // pred_fallthru
          _
        // Predicated region
        $region25: #{tpu_custom_call.1} parent=11 // pred_check
          %p234 = pneg %p130
        $region26: #{tpu_custom_call.1} parent=11 // pred_check_branch
          %236 = sbr.rel (%p234) target = $region28
        $region27: #{tpu_custom_call.1} parent=11 // pred_region
          %s238 = ssub.s32 128, 128
          %239 = vsyncadd [#allocation9], %s238
          %s241 = sshll.u32 [#allocation10], 4
          %s242 = int_to_ptr.vmem [resolvable:$true] %s241
          %244 = dma.hbm_to_vmem [thread:$0]  %s4, 128, %s242, [#allocation9]
        $region28: #{tpu_custom_call.1} parent=11 // pred_fallthru
          _
      $region12: #{tpu_custom_call.1} parent=5 // pred_fallthru
        _
      %p245 = scmp.lt.s32.totalorder %s20, 2
      // Predicated region
      $region29: #{tpu_custom_call.1} parent=5 // pred_check
        %p246 = pneg %p245
      $region30: #{tpu_custom_call.1} parent=5 // pred_check_branch
        %248 = sbr.rel (%p246) target = $region32
      $region31: #{tpu_custom_call.1} parent=5 // pred_region
        // Predicated region
        $region33: #{tpu_custom_call.1} parent=31 // pred_check
          %p249 = pneg %p40
        $region34: #{tpu_custom_call.1} parent=31 // pred_check_branch
          %251 = sbr.rel (%p249) target = $region36
        $region35: #{tpu_custom_call.1} parent=31 // pred_region
          %s252 = sand.u32 %s30, 1
          %s253 = scalar_lea.sflag [#allocation3], %s252
          %s254 = sand.u32 %s30, 1
          %s255 = smul.addr %s254, 4
          %s256 = scalar_lea.vmem [#allocation2], %s255
          %s258 = ssub.s32 64, 64
          %259 = vsyncadd %s253, %s258
          %s260 = smul.addr %s20, 64
          %s261 = scalar_lea.hbm %s0, %s260
          %s263 = sshll.u32 %s256, 4
          %s264 = int_to_ptr.vmem [resolvable:$true] %s263
          %266 = dma.hbm_to_vmem [thread:$0]  %s261, 64, %s264, %s253
        $region36: #{tpu_custom_call.1} parent=31 // pred_fallthru
          _
        // Predicated region
        $region37: #{tpu_custom_call.1} parent=31 // pred_check
          %p267 = pneg %p150
        $region38: #{tpu_custom_call.1} parent=31 // pred_check_branch
          %269 = sbr.rel (%p267) target = $region40
        $region39: #{tpu_custom_call.1} parent=31 // pred_region
          %p270 = scmp.lt.s32.totalorder %s20, 1
          %s271 = scalar_select %p270, %s20, 1
          %s272 = scalar_lea.vmem %s5, %s271
        $region40: #{tpu_custom_call.1} parent=31 // pred_fallthru
          _
      $region32: #{tpu_custom_call.1} parent=5 // pred_fallthru
        _
      %p273 = scmp.le.s32.totalorder 1, %s20
      %p274 = scmp.lt.s32.totalorder %s20, 3
      %p275 = pnand %p273, %p274
      %p276 = pneg %p275
      // Predicated region
      $region41: #{tpu_custom_call.1} parent=5 // pred_check
        _
      $region42: #{tpu_custom_call.1} parent=5 // pred_check_branch
        %278 = sbr.rel (%p275) target = $region44
      $region43: #{tpu_custom_call.1} parent=5 // pred_region
        %s279 = ssub.s32 %s20, 1
        %s280 = sand.u32 %s33, 1
        %s281 = scalar_lea.sflag [#allocation3], %s280
        %s282 = sand.u32 %s33, 1
        %s283 = smul.addr %s282, 4
        %s284 = scalar_lea.vmem [#allocation2], %s283
        // Predicated region
        $region45: #{tpu_custom_call.1} parent=43 // pred_check
          %p285 = pneg %p46
        $region46: #{tpu_custom_call.1} parent=43 // pred_check_branch
          %287 = sbr.rel (%p285) target = $region48
        $region47: #{tpu_custom_call.1} parent=43 // pred_region
          %288 = dma.done %s281, 64
        $region48: #{tpu_custom_call.1} parent=43 // pred_fallthru
          _
        // Predicated region
        $region49: #{tpu_custom_call.1} parent=43 // pred_check
          %p289 = pneg %p67
        $region50: #{tpu_custom_call.1} parent=43 // pred_check_branch
          %291 = sbr.rel (%p289) target = $region52
        $region51: #{tpu_custom_call.1} parent=43 // pred_region
          %292 = dma.done [#allocation6], 256
        $region52: #{tpu_custom_call.1} parent=43 // pred_fallthru
          _
        // Predicated region
        $region53: #{tpu_custom_call.1} parent=43 // pred_check
          %p293 = pneg %p88
        $region54: #{tpu_custom_call.1} parent=43 // pred_check_branch
          %295 = sbr.rel (%p293) target = $region56
        $region55: #{tpu_custom_call.1} parent=43 // pred_region
          %296 = dma.done [#allocation6], 256
        $region56: #{tpu_custom_call.1} parent=43 // pred_fallthru
          _
        // Predicated region
        $region57: #{tpu_custom_call.1} parent=43 // pred_check
          %p297 = pneg %p109
        $region58: #{tpu_custom_call.1} parent=43 // pred_check_branch
          %299 = sbr.rel (%p297) target = $region60
        $region59: #{tpu_custom_call.1} parent=43 // pred_region
          %300 = dma.done [#allocation9], 128
        $region60: #{tpu_custom_call.1} parent=43 // pred_fallthru
          _
        // Predicated region
        $region61: #{tpu_custom_call.1} parent=43 // pred_check
          %p301 = pneg %p130
        $region62: #{tpu_custom_call.1} parent=43 // pred_check_branch
          %303 = sbr.rel (%p301) target = $region64
        $region63: #{tpu_custom_call.1} parent=43 // pred_region
          %304 = dma.done [#allocation9], 128
        $region64: #{tpu_custom_call.1} parent=43 // pred_fallthru
          _
        %s305 = sand.u32 %s33, 1
        %s306 = scalar_lea.sflag [#allocation3], %s305
        %s307 = sand.u32 %s33, 1
        %s308 = smul.addr %s307, 4
        %s309 = scalar_lea.vmem [#allocation2], %s308
        %p310 = pneg %p46
        %p311 = pneg %p43
        %p312 = pneg %p67
        %p313 = pneg %p64
        %p314 = pneg %p88
        %p315 = pneg %p85
        %p316 = pneg %p109
        %p317 = pneg %p106
        %p318 = pneg %p130
        %p319 = pneg %p127
        %p320 = scmp.lt.s32.totalorder %s25, 1
        %s321 = scalar_select %p320, %s25, 1
        %s322 = scalar_lea.vmem %s5, %s321
        %p323 = pneg %p156
        %p324 = pneg %p153
        %p325 = pneg %p182
        %p326 = pneg %p179
        %s327 = sand.u32 %s169, 1
        %s328 = scalar_lea.sflag [#allocation4], %s327
        %s329 = sand.u32 %s169, 1
        %s330 = smul.addr %s329, 4
        %s331 = scalar_lea.vmem [#allocation11], %s330
        %p332 = scmp.lt.s32.totalorder %s25, 1
        %s333 = scalar_select %p332, %s25, 1
        %s334 = scalar_lea.vmem %s5, %s333
        %v336 = vld [vmem:[%s284] sm:$0xf]
        %v337 = vunpack.c.l.bf16 %v336
        %v338 = vld [vmem:[#allocation8] sm:$0x3f]
        %v339 = vld [vmem:[#allocation5] sm:$0xf]
        %v340 = vld [vmem:[#allocation5 + $0x4] sm:$0xf]
        %v341 = vld [vmem:[#allocation5 + $0x8] sm:$0xf]
        %v342 = vld [vmem:[#allocation5 + $0xc] sm:$0xf]
        %v347 = vunpack.c.l.b16 %v339
        %v348 = vunpack.c.l.b16 %v340
        %v349 = vunpack.c.l.b16 %v341
        %v350 = vunpack.c.l.b16 %v342
        %v351 = vpack.c.b16 %v348, %v347
        %v352 = vpack.c.b16 %v350, %v349
        %vm355 = vcmask 261120
        %v357 = vsel %vm355, %v336, 0
        %359 = vmatprep.subr.bf16.mxu0 0
        %360 = vmatpush1.bf16.msra.mxu0 0
        %361 = vmatprep.subr.bf16.mxu0 0
        %362 = vmatpush1.bf16.msra.mxu0 0
        %363 = vmatprep.subr.bf16.mxu0 0
        %364 = vmatpush1.bf16.msra.mxu0 0
        %365 = vmatprep.subr.bf16.mxu0 0
        %366 = vmatpush1.bf16.msra.mxu0 0
        %367 = vmatprep.subr.bf16.mxu0 0
        %368 = vmatpush1.bf16.msra.mxu0 0
        %369 = vmatprep.subr.bf16.mxu0 0
        %370 = vmatpush1.bf16.msra.mxu0 0
        %371 = vmatprep.subr.bf16.mxu0 0
        %372 = vmatpush1.bf16.msra.mxu0 %v352
        %373 = vmatprep.subr.bf16.mxu0 0
        %374 = vmatpush1.bf16.msra.mxu0 %v351
        %375 = vmatprep.subr.bf16.mxu0 0
        %376 = vmatpush2.bf16.msra.mxu0 0
        %377 = vmatprep.subr.bf16.mxu0 0
        %378 = vmatpush2.bf16.msra.mxu0 0
        %379 = vmatprep.subr.bf16.mxu0 0
        %380 = vmatpush2.bf16.msra.mxu0 0
        %381 = vmatprep.subr.bf16.mxu0 0
        %382 = vmatpush2.bf16.msra.mxu0 0
        %383 = vmatprep.subr.bf16.mxu0 0
        %384 = vmatpush2.bf16.msra.mxu0 0
        %385 = vmatprep.subr.bf16.mxu0 0
        %386 = vmatpush2.bf16.msra.mxu0 0
        %387 = vmatprep.subr.bf16.mxu0 0
        %388 = vmatpush2.bf16.msra.mxu0 0
        %389 = vmatprep.subr.bf16.mxu0 0
        %390 = vmatpush2.bf16.msra.mxu0 0
        %391 = vmatprep.mubr.bf16.mxu0 0
        %392 = vmatmul.mubr.bf16.gmra.mxu0 %v357
        %v393 = vpop.f32.mrf.mxu0
        %v394 = vadd.f32 0.0, %v393
        %v395 = vpop.f32.mrf.mxu0
        %v396 = vpop.f32.mrf.mxu0
        %v397 = vpop.f32.mrf.mxu0
        %398 = vdwg.mxu0
        %v399 = vlaneseq
        %v400 = vshrl.u32 %v399, 7
        %v401 = vsub.s32 0, %v400
        %v402 = vrot.slane %v338, %v401
        %v403 = vadd.f32 %v394, %v402
        %v404 = vlaneseq
        %v405 = vshrl.u32 %v404, 7
        %v406 = vsub.s32 1, %v405
        %v407 = vrot.slane %v338, %v406
        %409 = vrot.lane.b32.xlu0 %v407, 32
        %v410 = vpop.permute.xlu0 %409
        %v412 = vadd.f32 %v394, %v410
        %v413 = vlaneseq
        %v414 = vshrl.u32 %v413, 7
        %v415 = vsub.s32 2, %v414
        %v416 = vrot.slane %v338, %v415
        %418 = vrot.lane.b32.xlu0 %v416, 64
        %v419 = vpop.permute.xlu0 %418
        %v421 = vadd.f32 %v394, %v419
        %v422 = vld [vmem:[#allocation10] sm:$0xff]
        %v423 = vld [vmem:[%s334] sm:$0x1]
        %v425 = vlaneseq
        %v426 = vshrl.u32 %v425, 7
        %v427 = vsub.s32 0, %v426
        %v428 = vrot.slane %v423, %v427
        %v430 = vadd.f32 %v422, %v428
        %v431 = vld [vmem:[#allocation7] sm:$0xf]
        %v432 = vld [vmem:[#allocation7 + $0x4] sm:$0xf]
        %v433 = vld [vmem:[#allocation7 + $0x8] sm:$0xf]
        %v434 = vld [vmem:[#allocation7 + $0xc] sm:$0xf]
        %v435 = vpack.c.bf16 %v403, %v403
        %v436 = vpack.c.bf16 %v412, %v412
        %v437 = vpack.c.bf16 %v421, %v421
        %439 = vrot.lane.b32.xlu0 %v436, 96
        %v440 = vpop.permute.xlu0 %439
        %vm441 = vcmask 64512
        %v443 = vsel %vm441, %v435, 0
        %v446 = vsel %vm441, %v440, 0
        %448 = vmatprep.subr.bf16.mxu0 0
        %449 = vmatpush1.bf16.xpose.msra.mxu0 0
        %450 = vmatprep.subr.bf16.mxu0 0
        %451 = vmatpush1.bf16.xpose.msra.mxu0 0
        %452 = vmatprep.subr.bf16.mxu0 0
        %453 = vmatpush1.bf16.xpose.msra.mxu0 0
        %454 = vmatprep.subr.bf16.mxu0 0
        %455 = vmatpush1.bf16.xpose.msra.mxu0 0
        %456 = vmatprep.subr.bf16.mxu0 0
        %457 = vmatpush1.bf16.xpose.msra.mxu0 0
        %458 = vmatprep.subr.bf16.mxu0 0
        %459 = vmatpush1.bf16.xpose.msra.mxu0 0
        %460 = vmatprep.subr.bf16.mxu0 0
        %461 = vmatpush1.bf16.xpose.msra.mxu0 0
        %462 = vmatprep.subr.bf16.mxu0 0
        %463 = vmatpush1.bf16.xpose.msra.mxu0 %v446
        %464 = vmatprep.subr.bf16.mxu0 0
        %465 = vmatpush2.bf16.xpose.msra.mxu0 0
        %466 = vmatprep.subr.bf16.mxu0 0
        %467 = vmatpush2.bf16.xpose.msra.mxu0 0
        %468 = vmatprep.subr.bf16.mxu0 0
        %469 = vmatpush2.bf16.xpose.msra.mxu0 0
        %470 = vmatprep.subr.bf16.mxu0 0
        %471 = vmatpush2.bf16.xpose.msra.mxu0 0
        %472 = vmatprep.subr.bf16.mxu0 0
        %473 = vmatpush2.bf16.xpose.msra.mxu0 0
        %474 = vmatprep.subr.bf16.mxu0 0
        %475 = vmatpush2.bf16.xpose.msra.mxu0 0
        %476 = vmatprep.subr.bf16.mxu0 0
        %477 = vmatpush2.bf16.xpose.msra.mxu0 0
        %478 = vmatprep.subr.bf16.mxu0 0
        %479 = vmatpush2.bf16.xpose.msra.mxu0 0
        %480 = vmatprep.mubr.bf16.mxu0 0
        %481 = vmatmul.mubr.bf16.gmra.mxu0 %v443
        %v482 = vpop.f32.mrf.mxu0
        %v483 = vadd.f32 %v430, %v482
        %v484 = vpop.f32.mrf.mxu0
        %v485 = vpop.f32.mrf.mxu0
        %v486 = vpop.f32.mrf.mxu0
        %487 = vdwg.mxu0
        %v488 = vsel %vm441, %v483, -inf
        %489 = vmax.xlane.f32.xlu0 %v488
        %v490 = vpop.xlane.xlu0 %489
        %v491 = vsub.f32 %v483, %v490
        %v492 = vmul.f32 %v491, 1.442695
        %v493 = vpow.pop %v492
        %v494 = vsel %vm441, %v493, 0.0
        %495 = vadd.xlane.f32.xlu0 %v494
        %v496 = vpop.xlane.xlu0 %495
        %v497 = vpack.c.bf16 %v493, %v493
        %499 = vrot.lane.b32.xlu0 %v437, 64
        %v500 = vpop.permute.xlu0 %499
        %v502 = vsel %vm441, %v497, 0
        %vm504 = vcmask 1043456
        %v506 = vsel %vm504, %v500, 0
        %508 = vmatprep.subr.bf16.mxu0 0
        %509 = vmatpush1.bf16.msra.mxu0 0
        %510 = vmatprep.subr.bf16.mxu0 0
        %511 = vmatpush1.bf16.msra.mxu0 0
        %512 = vmatprep.subr.bf16.mxu0 0
        %513 = vmatpush1.bf16.msra.mxu0 0
        %514 = vmatprep.subr.bf16.mxu0 0
        %515 = vmatpush1.bf16.msra.mxu0 0
        %516 = vmatprep.subr.bf16.mxu0 0
        %517 = vmatpush1.bf16.msra.mxu0 0
        %518 = vmatprep.subr.bf16.mxu0 0
        %519 = vmatpush1.bf16.msra.mxu0 0
        %520 = vmatprep.subr.bf16.mxu0 0
        %521 = vmatpush1.bf16.msra.mxu0 0
        %522 = vmatprep.subr.bf16.mxu0 0
        %523 = vmatpush1.bf16.msra.mxu0 %v506
        %524 = vmatprep.subr.bf16.mxu0 0
        %525 = vmatpush2.bf16.msra.mxu0 0
        %526 = vmatprep.subr.bf16.mxu0 0
        %527 = vmatpush2.bf16.msra.mxu0 0
        %528 = vmatprep.subr.bf16.mxu0 0
        %529 = vmatpush2.bf16.msra.mxu0 0
        %530 = vmatprep.subr.bf16.mxu0 0
        %531 = vmatpush2.bf16.msra.mxu0 0
        %532 = vmatprep.subr.bf16.mxu0 0
        %533 = vmatpush2.bf16.msra.mxu0 0
        %534 = vmatprep.subr.bf16.mxu0 0
        %535 = vmatpush2.bf16.msra.mxu0 0
        %536 = vmatprep.subr.bf16.mxu0 0
        %537 = vmatpush2.bf16.msra.mxu0 0
        %538 = vmatprep.subr.bf16.mxu0 0
        %539 = vmatpush2.bf16.msra.mxu0 0
        %540 = vmatprep.mubr.bf16.mxu0 0
        %541 = vmatmul.mubr.bf16.gmra.mxu0 %v502
        %v542 = vpop.f32.mrf.mxu0
        %v543 = vadd.f32 0.0, %v542
        %v544 = vpop.f32.mrf.mxu0
        %v545 = vpop.f32.mrf.mxu0
        %v546 = vpop.f32.mrf.mxu0
        %547 = vdwg.mxu0
        %v548 = vrcp.pop %v496
        %v549 = vmul.f32 %v543, %v548
        %551 = vrot.lane.b32.xlu0 %v435, 120
        %v552 = vpop.permute.xlu0 %551
        %553 = vrot.lane.b32.xlu0 %v436, 88
        %v554 = vpop.permute.xlu0 %553
        %v556 = vsel %vm441, %v552, 0
        %v559 = vsel %vm441, %v554, 0
        %561 = vmatprep.subr.bf16.mxu0 0
        %562 = vmatpush1.bf16.xpose.msra.mxu0 0
        %563 = vmatprep.subr.bf16.mxu0 0
        %564 = vmatpush1.bf16.xpose.msra.mxu0 0
        %565 = vmatprep.subr.bf16.mxu0 0
        %566 = vmatpush1.bf16.xpose.msra.mxu0 0
        %567 = vmatprep.subr.bf16.mxu0 0
        %568 = vmatpush1.bf16.xpose.msra.mxu0 0
        %569 = vmatprep.subr.bf16.mxu0 0
        %570 = vmatpush1.bf16.xpose.msra.mxu0 0
        %571 = vmatprep.subr.bf16.mxu0 0
        %572 = vmatpush1.bf16.xpose.msra.mxu0 0
        %573 = vmatprep.subr.bf16.mxu0 0
        %574 = vmatpush1.bf16.xpose.msra.mxu0 0
        %575 = vmatprep.subr.bf16.mxu0 0
        %576 = vmatpush1.bf16.xpose.msra.mxu0 %v559
        %577 = vmatprep.subr.bf16.mxu0 0
        %578 = vmatpush2.bf16.xpose.msra.mxu0 0
        %579 = vmatprep.subr.bf16.mxu0 0
        %580 = vmatpush2.bf16.xpose.msra.mxu0 0
        %581 = vmatprep.subr.bf16.mxu0 0
        %582 = vmatpush2.bf16.xpose.msra.mxu0 0
        %583 = vmatprep.subr.bf16.mxu0 0
        %584 = vmatpush2.bf16.xpose.msra.mxu0 0
        %585 = vmatprep.subr.bf16.mxu0 0
        %586 = vmatpush2.bf16.xpose.msra.mxu0 0
        %587 = vmatprep.subr.bf16.mxu0 0
        %588 = vmatpush2.bf16.xpose.msra.mxu0 0
        %589 = vmatprep.subr.bf16.mxu0 0
        %590 = vmatpush2.bf16.xpose.msra.mxu0 0
        %591 = vmatprep.subr.bf16.mxu0 0
        %592 = vmatpush2.bf16.xpose.msra.mxu0 0
        %593 = vmatprep.mubr.bf16.mxu0 0
        %594 = vmatmul.mubr.bf16.gmra.mxu0 %v556
        %v595 = vpop.f32.mrf.mxu0
        %v596 = vadd.f32 %v430, %v595
        %v597 = vpop.f32.mrf.mxu0
        %v598 = vpop.f32.mrf.mxu0
        %v599 = vpop.f32.mrf.mxu0
        %600 = vdwg.mxu0
        %v601 = vsel %vm441, %v596, -inf
        %602 = vmax.xlane.f32.xlu0 %v601
        %v603 = vpop.xlane.xlu0 %602
        %v604 = vsub.f32 %v596, %v603
        %v605 = vmul.f32 %v604, 1.442695
        %v606 = vpow.pop %v605
        %v607 = vsel %vm441, %v606, 0.0
        %608 = vadd.xlane.f32.xlu0 %v607
        %v609 = vpop.xlane.xlu0 %608
        %v610 = vpack.c.bf16 %v606, %v606
        %611 = vrot.lane.b32.xlu0 %v437, 56
        %v612 = vpop.permute.xlu0 %611
        %v614 = vsel %vm441, %v610, 0
        %v617 = vsel %vm504, %v612, 0
        %619 = vmatprep.subr.bf16.mxu0 0
        %620 = vmatpush1.bf16.msra.mxu0 0
        %621 = vmatprep.subr.bf16.mxu0 0
        %622 = vmatpush1.bf16.msra.mxu0 0
        %623 = vmatprep.subr.bf16.mxu0 0
        %624 = vmatpush1.bf16.msra.mxu0 0
        %625 = vmatprep.subr.bf16.mxu0 0
        %626 = vmatpush1.bf16.msra.mxu0 0
        %627 = vmatprep.subr.bf16.mxu0 0
        %628 = vmatpush1.bf16.msra.mxu0 0
        %629 = vmatprep.subr.bf16.mxu0 0
        %630 = vmatpush1.bf16.msra.mxu0 0
        %631 = vmatprep.subr.bf16.mxu0 0
        %632 = vmatpush1.bf16.msra.mxu0 0
        %633 = vmatprep.subr.bf16.mxu0 0
        %634 = vmatpush1.bf16.msra.mxu0 %v617
        %635 = vmatprep.subr.bf16.mxu0 0
        %636 = vmatpush2.bf16.msra.mxu0 0
        %637 = vmatprep.subr.bf16.mxu0 0
        %638 = vmatpush2.bf16.msra.mxu0 0
        %639 = vmatprep.subr.bf16.mxu0 0
        %640 = vmatpush2.bf16.msra.mxu0 0
        %641 = vmatprep.subr.bf16.mxu0 0
        %642 = vmatpush2.bf16.msra.mxu0 0
        %643 = vmatprep.subr.bf16.mxu0 0
        %644 = vmatpush2.bf16.msra.mxu0 0
        %645 = vmatprep.subr.bf16.mxu0 0
        %646 = vmatpush2.bf16.msra.mxu0 0
        %647 = vmatprep.subr.bf16.mxu0 0
        %648 = vmatpush2.bf16.msra.mxu0 0
        %649 = vmatprep.subr.bf16.mxu0 0
        %650 = vmatpush2.bf16.msra.mxu0 0
        %651 = vmatprep.mubr.bf16.mxu0 0
        %652 = vmatmul.mubr.bf16.gmra.mxu0 %v614
        %v653 = vpop.f32.mrf.mxu0
        %v654 = vadd.f32 0.0, %v653
        %v655 = vpop.f32.mrf.mxu0
        %v656 = vpop.f32.mrf.mxu0
        %v657 = vpop.f32.mrf.mxu0
        %658 = vdwg.mxu0
        %v659 = vrcp.pop %v609
        %v660 = vmul.f32 %v654, %v659
        %661 = vrot.lane.b32.xlu0 %v435, 112
        %v662 = vpop.permute.xlu0 %661
        %663 = vrot.lane.b32.xlu0 %v436, 80
        %v664 = vpop.permute.xlu0 %663
        %v666 = vsel %vm441, %v662, 0
        %v669 = vsel %vm441, %v664, 0
        %671 = vmatprep.subr.bf16.mxu0 0
        %672 = vmatpush1.bf16.xpose.msra.mxu0 0
        %673 = vmatprep.subr.bf16.mxu0 0
        %674 = vmatpush1.bf16.xpose.msra.mxu0 0
        %675 = vmatprep.subr.bf16.mxu0 0
        %676 = vmatpush1.bf16.xpose.msra.mxu0 0
        %677 = vmatprep.subr.bf16.mxu0 0
        %678 = vmatpush1.bf16.xpose.msra.mxu0 0
        %679 = vmatprep.subr.bf16.mxu0 0
        %680 = vmatpush1.bf16.xpose.msra.mxu0 0
        %681 = vmatprep.subr.bf16.mxu0 0
        %682 = vmatpush1.bf16.xpose.msra.mxu0 0
        %683 = vmatprep.subr.bf16.mxu0 0
        %684 = vmatpush1.bf16.xpose.msra.mxu0 0
        %685 = vmatprep.subr.bf16.mxu0 0
        %686 = vmatpush1.bf16.xpose.msra.mxu0 %v669
        %687 = vmatprep.subr.bf16.mxu0 0
        %688 = vmatpush2.bf16.xpose.msra.mxu0 0
        %689 = vmatprep.subr.bf16.mxu0 0
        %690 = vmatpush2.bf16.xpose.msra.mxu0 0
        %691 = vmatprep.subr.bf16.mxu0 0
        %692 = vmatpush2.bf16.xpose.msra.mxu0 0
        %693 = vmatprep.subr.bf16.mxu0 0
        %694 = vmatpush2.bf16.xpose.msra.mxu0 0
        %695 = vmatprep.subr.bf16.mxu0 0
        %696 = vmatpush2.bf16.xpose.msra.mxu0 0
        %697 = vmatprep.subr.bf16.mxu0 0
        %698 = vmatpush2.bf16.xpose.msra.mxu0 0
        %699 = vmatprep.subr.bf16.mxu0 0
        %700 = vmatpush2.bf16.xpose.msra.mxu0 0
        %701 = vmatprep.subr.bf16.mxu0 0
        %702 = vmatpush2.bf16.xpose.msra.mxu0 0
        %703 = vmatprep.mubr.bf16.mxu0 0
        %704 = vmatmul.mubr.bf16.gmra.mxu0 %v666
        %v705 = vpop.f32.mrf.mxu0
        %v706 = vadd.f32 %v430, %v705
        %v707 = vpop.f32.mrf.mxu0
        %v708 = vpop.f32.mrf.mxu0
        %v709 = vpop.f32.mrf.mxu0
        %710 = vdwg.mxu0
        %v711 = vsel %vm441, %v706, -inf
        %712 = vmax.xlane.f32.xlu0 %v711
        %v713 = vpop.xlane.xlu0 %712
        %v714 = vsub.f32 %v706, %v713
        %v715 = vmul.f32 %v714, 1.442695
        %v716 = vpow.pop %v715
        %v717 = vsel %vm441, %v716, 0.0
        %718 = vadd.xlane.f32.xlu0 %v717
        %v719 = vpop.xlane.xlu0 %718
        %v720 = vpack.c.bf16 %v716, %v716
        %721 = vrot.lane.b32.xlu0 %v437, 48
        %v722 = vpop.permute.xlu0 %721
        %v724 = vsel %vm441, %v720, 0
        %v727 = vsel %vm504, %v722, 0
        %729 = vmatprep.subr.bf16.mxu0 0
        %730 = vmatpush1.bf16.msra.mxu0 0
        %731 = vmatprep.subr.bf16.mxu0 0
        %732 = vmatpush1.bf16.msra.mxu0 0
        %733 = vmatprep.subr.bf16.mxu0 0
        %734 = vmatpush1.bf16.msra.mxu0 0
        %735 = vmatprep.subr.bf16.mxu0 0
        %736 = vmatpush1.bf16.msra.mxu0 0
        %737 = vmatprep.subr.bf16.mxu0 0
        %738 = vmatpush1.bf16.msra.mxu0 0
        %739 = vmatprep.subr.bf16.mxu0 0
        %740 = vmatpush1.bf16.msra.mxu0 0
        %741 = vmatprep.subr.bf16.mxu0 0
        %742 = vmatpush1.bf16.msra.mxu0 0
        %743 = vmatprep.subr.bf16.mxu0 0
        %744 = vmatpush1.bf16.msra.mxu0 %v727
        %745 = vmatprep.subr.bf16.mxu0 0
        %746 = vmatpush2.bf16.msra.mxu0 0
        %747 = vmatprep.subr.bf16.mxu0 0
        %748 = vmatpush2.bf16.msra.mxu0 0
        %749 = vmatprep.subr.bf16.mxu0 0
        %750 = vmatpush2.bf16.msra.mxu0 0
        %751 = vmatprep.subr.bf16.mxu0 0
        %752 = vmatpush2.bf16.msra.mxu0 0
        %753 = vmatprep.subr.bf16.mxu0 0
        %754 = vmatpush2.bf16.msra.mxu0 0
        %755 = vmatprep.subr.bf16.mxu0 0
        %756 = vmatpush2.bf16.msra.mxu0 0
        %757 = vmatprep.subr.bf16.mxu0 0
        %758 = vmatpush2.bf16.msra.mxu0 0
        %759 = vmatprep.subr.bf16.mxu0 0
        %760 = vmatpush2.bf16.msra.mxu0 0
        %761 = vmatprep.mubr.bf16.mxu0 0
        %762 = vmatmul.mubr.bf16.gmra.mxu0 %v724
        %v763 = vpop.f32.mrf.mxu0
        %v764 = vadd.f32 0.0, %v763
        %v765 = vpop.f32.mrf.mxu0
        %v766 = vpop.f32.mrf.mxu0
        %v767 = vpop.f32.mrf.mxu0
        %768 = vdwg.mxu0
        %v769 = vrcp.pop %v719
        %v770 = vmul.f32 %v764, %v769
        %771 = vrot.lane.b32.xlu0 %v435, 104
        %v772 = vpop.permute.xlu0 %771
        %773 = vrot.lane.b32.xlu0 %v436, 72
        %v774 = vpop.permute.xlu0 %773
        %v776 = vsel %vm441, %v772, 0
        %v779 = vsel %vm441, %v774, 0
        %781 = vmatprep.subr.bf16.mxu0 0
        %782 = vmatpush1.bf16.xpose.msra.mxu0 0
        %783 = vmatprep.subr.bf16.mxu0 0
        %784 = vmatpush1.bf16.xpose.msra.mxu0 0
        %785 = vmatprep.subr.bf16.mxu0 0
        %786 = vmatpush1.bf16.xpose.msra.mxu0 0
        %787 = vmatprep.subr.bf16.mxu0 0
        %788 = vmatpush1.bf16.xpose.msra.mxu0 0
        %789 = vmatprep.subr.bf16.mxu0 0
        %790 = vmatpush1.bf16.xpose.msra.mxu0 0
        %791 = vmatprep.subr.bf16.mxu0 0
        %792 = vmatpush1.bf16.xpose.msra.mxu0 0
        %793 = vmatprep.subr.bf16.mxu0 0
        %794 = vmatpush1.bf16.xpose.msra.mxu0 0
        %795 = vmatprep.subr.bf16.mxu0 0
        %796 = vmatpush1.bf16.xpose.msra.mxu0 %v779
        %797 = vmatprep.subr.bf16.mxu0 0
        %798 = vmatpush2.bf16.xpose.msra.mxu0 0
        %799 = vmatprep.subr.bf16.mxu0 0
        %800 = vmatpush2.bf16.xpose.msra.mxu0 0
        %801 = vmatprep.subr.bf16.mxu0 0
        %802 = vmatpush2.bf16.xpose.msra.mxu0 0
        %803 = vmatprep.subr.bf16.mxu0 0
        %804 = vmatpush2.bf16.xpose.msra.mxu0 0
        %805 = vmatprep.subr.bf16.mxu0 0
        %806 = vmatpush2.bf16.xpose.msra.mxu0 0
        %807 = vmatprep.subr.bf16.mxu0 0
        %808 = vmatpush2.bf16.xpose.msra.mxu0 0
        %809 = vmatprep.subr.bf16.mxu0 0
        %810 = vmatpush2.bf16.xpose.msra.mxu0 0
        %811 = vmatprep.subr.bf16.mxu0 0
        %812 = vmatpush2.bf16.xpose.msra.mxu0 0
        %813 = vmatprep.mubr.bf16.mxu0 0
        %814 = vmatmul.mubr.bf16.gmra.mxu0 %v776
        %v815 = vpop.f32.mrf.mxu0
        %v816 = vadd.f32 %v430, %v815
        %v817 = vpop.f32.mrf.mxu0
        %v818 = vpop.f32.mrf.mxu0
        %v819 = vpop.f32.mrf.mxu0
        %820 = vdwg.mxu0
        %v821 = vsel %vm441, %v816, -inf
        %822 = vmax.xlane.f32.xlu0 %v821
        %v823 = vpop.xlane.xlu0 %822
        %v824 = vsub.f32 %v816, %v823
        %v825 = vmul.f32 %v824, 1.442695
        %v826 = vpow.pop %v825
        %v827 = vsel %vm441, %v826, 0.0
        %828 = vadd.xlane.f32.xlu0 %v827
        %v829 = vpop.xlane.xlu0 %828
        %v830 = vpack.c.bf16 %v826, %v826
        %831 = vrot.lane.b32.xlu0 %v437, 40
        %v832 = vpop.permute.xlu0 %831
        %v834 = vsel %vm441, %v830, 0
        %v837 = vsel %vm504, %v832, 0
        %839 = vmatprep.subr.bf16.mxu0 0
        %840 = vmatpush1.bf16.msra.mxu0 0
        %841 = vmatprep.subr.bf16.mxu0 0
        %842 = vmatpush1.bf16.msra.mxu0 0
        %843 = vmatprep.subr.bf16.mxu0 0
        %844 = vmatpush1.bf16.msra.mxu0 0
        %845 = vmatprep.subr.bf16.mxu0 0
        %846 = vmatpush1.bf16.msra.mxu0 0
        %847 = vmatprep.subr.bf16.mxu0 0
        %848 = vmatpush1.bf16.msra.mxu0 0
        %849 = vmatprep.subr.bf16.mxu0 0
        %850 = vmatpush1.bf16.msra.mxu0 0
        %851 = vmatprep.subr.bf16.mxu0 0
        %852 = vmatpush1.bf16.msra.mxu0 0
        %853 = vmatprep.subr.bf16.mxu0 0
        %854 = vmatpush1.bf16.msra.mxu0 %v837
        %855 = vmatprep.subr.bf16.mxu0 0
        %856 = vmatpush2.bf16.msra.mxu0 0
        %857 = vmatprep.subr.bf16.mxu0 0
        %858 = vmatpush2.bf16.msra.mxu0 0
        %859 = vmatprep.subr.bf16.mxu0 0
        %860 = vmatpush2.bf16.msra.mxu0 0
        %861 = vmatprep.subr.bf16.mxu0 0
        %862 = vmatpush2.bf16.msra.mxu0 0
        %863 = vmatprep.subr.bf16.mxu0 0
        %864 = vmatpush2.bf16.msra.mxu0 0
        %865 = vmatprep.subr.bf16.mxu0 0
        %866 = vmatpush2.bf16.msra.mxu0 0
        %867 = vmatprep.subr.bf16.mxu0 0
        %868 = vmatpush2.bf16.msra.mxu0 0
        %869 = vmatprep.subr.bf16.mxu0 0
        %870 = vmatpush2.bf16.msra.mxu0 0
        %871 = vmatprep.mubr.bf16.mxu0 0
        %872 = vmatmul.mubr.bf16.gmra.mxu0 %v834
        %v873 = vpop.f32.mrf.mxu0
        %v874 = vadd.f32 0.0, %v873
        %v875 = vpop.f32.mrf.mxu0
        %v876 = vpop.f32.mrf.mxu0
        %v877 = vpop.f32.mrf.mxu0
        %878 = vdwg.mxu0
        %v879 = vrcp.pop %v829
        %v880 = vmul.f32 %v874, %v879
        %882 = vrot.lane.b32.xlu0 %v660, 8
        %v883 = vpop.permute.xlu0 %882
        %886 = vrot.lane.b32.xlu0 %v770, 16
        %v887 = vpop.permute.xlu0 %886
        %890 = vrot.lane.b32.xlu0 %v880, 24
        %v891 = vpop.permute.xlu0 %890
        %v893 = vsel %vm441, %v549, %v883
        %vm894 = vcmask 130048
        %v895 = vsel %vm894, %v893, %v887
        %vm896 = vcmask 195584
        %v897 = vsel %vm896, %v895, %v891
        %v898 = vpack.c.bf16 %v897, %v897
        %v899 = vlaneseq
        %v900 = vshrl.u32 %v899, 7
        %v901 = vsub.s32 3, %v900
        %v902 = vrot.slane %v338, %v901
        %v907 = vunpack.c.l.b16 %v431
        %v908 = vunpack.c.l.b16 %v432
        %v909 = vunpack.c.l.b16 %v433
        %v910 = vunpack.c.l.b16 %v434
        %v911 = vpack.c.b16 %v908, %v907
        %v912 = vpack.c.b16 %v910, %v909
        %v916 = vsel %vm355, %v898, 0
        %918 = vmatprep.subr.bf16.mxu0 0
        %919 = vmatpush1.bf16.msra.mxu0 0
        %920 = vmatprep.subr.bf16.mxu0 0
        %921 = vmatpush1.bf16.msra.mxu0 0
        %922 = vmatprep.subr.bf16.mxu0 0
        %923 = vmatpush1.bf16.msra.mxu0 0
        %924 = vmatprep.subr.bf16.mxu0 0
        %925 = vmatpush1.bf16.msra.mxu0 0
        %926 = vmatprep.subr.bf16.mxu0 0
        %927 = vmatpush1.bf16.msra.mxu0 0
        %928 = vmatprep.subr.bf16.mxu0 0
        %929 = vmatpush1.bf16.msra.mxu0 0
        %930 = vmatprep.subr.bf16.mxu0 0
        %931 = vmatpush1.bf16.msra.mxu0 %v912
        %932 = vmatprep.subr.bf16.mxu0 0
        %933 = vmatpush1.bf16.msra.mxu0 %v911
        %934 = vmatprep.subr.bf16.mxu0 0
        %935 = vmatpush2.bf16.msra.mxu0 0
        %936 = vmatprep.subr.bf16.mxu0 0
        %937 = vmatpush2.bf16.msra.mxu0 0
        %938 = vmatprep.subr.bf16.mxu0 0
        %939 = vmatpush2.bf16.msra.mxu0 0
        %940 = vmatprep.subr.bf16.mxu0 0
        %941 = vmatpush2.bf16.msra.mxu0 0
        %942 = vmatprep.subr.bf16.mxu0 0
        %943 = vmatpush2.bf16.msra.mxu0 0
        %944 = vmatprep.subr.bf16.mxu0 0
        %945 = vmatpush2.bf16.msra.mxu0 0
        %946 = vmatprep.subr.bf16.mxu0 0
        %947 = vmatpush2.bf16.msra.mxu0 0
        %948 = vmatprep.subr.bf16.mxu0 0
        %949 = vmatpush2.bf16.msra.mxu0 0
        %950 = vmatprep.mubr.bf16.mxu0 0
        %951 = vmatmul.mubr.bf16.gmra.mxu0 %v916
        %v952 = vpop.f32.mrf.mxu0
        %v953 = vadd.f32 %v902, %v952
        %v954 = vpop.f32.mrf.mxu0
        %v955 = vpop.f32.mrf.mxu0
        %v956 = vpop.f32.mrf.mxu0
        %957 = vdwg.mxu0
        %v958 = vadd.f32 %v953, %v337
        %v959 = vsel %vm355, %v958, 0.0
        %960 = vadd.xlane.f32.xlu0 %v959
        %v961 = vpop.xlane.xlu0 %960
        %v962 = vrcp.pop 32.0
        %v963 = vmul.f32 %v961, %v962
        %v964 = vsub.f32 %v958, %v963
        %v965 = vmul.f32 %v964, %v964
        %v966 = vsel %vm355, %v965, 0.0
        %967 = vadd.xlane.f32.xlu0 %v966
        %v968 = vpop.xlane.xlu0 %967
        %v969 = vmul.f32 %v968, %v962
        %v970 = vadd.f32 %v969, 1e-05
        %v971 = vrsqrt.pop %v970
        %v972 = vmul.f32 %v964, %v971
        %v973 = vlaneseq
        %v974 = vshrl.u32 %v973, 7
        %v975 = vsub.s32 4, %v974
        %v976 = vrot.slane %v338, %v975
        %v977 = vmul.f32 %v972, %v976
        %v978 = vlaneseq
        %v979 = vshrl.u32 %v978, 7
        %v980 = vsub.s32 5, %v979
        %v981 = vrot.slane %v338, %v980
        %v982 = vadd.f32 %v977, %v981
        %v983 = vpack.c.bf16 %v982, %v982
        %vm984 = vcmask 257024
        %985 = vst.msk [vmem:[%s331] sm:$0xf] %vm984, %v983
        %s986 = sand.u32 %s169, 1
        %s987 = scalar_lea.sflag [#allocation4], %s986
        %s988 = sand.u32 %s169, 1
        %s989 = smul.addr %s988, 4
        %s990 = scalar_lea.vmem [#allocation11], %s989
        // Predicated region
        $region65: #{tpu_custom_call.1} parent=43 // pred_check
          %p991 = pneg %p179
        $region66: #{tpu_custom_call.1} parent=43 // pred_check_branch
          %993 = sbr.rel (%p991) target = $region68
        $region67: #{tpu_custom_call.1} parent=43 // pred_region
          %s995 = ssub.s32 64, 64
          %996 = vsyncadd %s987, %s995
          %s997 = smul.addr %s25, 64
          %s998 = scalar_lea.hbm %s6, %s997
          %s1000 = sshll.u32 %s990, 4
          %s1001 = int_to_ptr.vmem [resolvable:$true] %s1000
          %1003 = dma.vmem_to_hbm [thread:$0]  %s1001, 64, %s998, %s987
        $region68: #{tpu_custom_call.1} parent=43 // pred_fallthru
          _
      $region44: #{tpu_custom_call.1} parent=5 // pred_fallthru
        _
      %p1004 = scmp.le.s32.totalorder 2, %s20
      // Predicated region
      $region69: #{tpu_custom_call.1} parent=5 // pred_check
        %p1005 = pneg %p1004
      $region70: #{tpu_custom_call.1} parent=5 // pred_check_branch
        %1007 = sbr.rel (%p1005) target = $region72
      $region71: #{tpu_custom_call.1} parent=5 // pred_region
        %s1008 = ssub.s32 %s20, 2
        // Predicated region
        $region73: #{tpu_custom_call.1} parent=71 // pred_check
          %p1009 = pneg %p185
        $region74: #{tpu_custom_call.1} parent=71 // pred_check_branch
          %1011 = sbr.rel (%p1009) target = $region76
        $region75: #{tpu_custom_call.1} parent=71 // pred_region
          %s1012 = sand.u32 %s170, 1
          %s1013 = scalar_lea.sflag [#allocation4], %s1012
          %s1014 = sand.u32 %s170, 1
          %s1015 = smul.addr %s1014, 4
          %s1016 = scalar_lea.vmem [#allocation11], %s1015
          %1017 = dma.done %s1013, 64
        $region76: #{tpu_custom_call.1} parent=71 // pred_fallthru
          _
      $region72: #{tpu_custom_call.1} parent=5 // pred_fallthru
        _
    $region6: #{tpu_custom_call.1} parent=1 // loop_footer
      %s24 = sadd.s32 1, %s20
    $region7: #{tpu_custom_call.1} parent=1 // loop_footer_branch
      %19 = sbr.rel target = $region3
    $region8: #{tpu_custom_call.1} parent=1 // loop_exit
      _
    %1018 = vsyncpa [#allocation3], 1
    %s1019 = scalar_lea.sflag [#allocation3], 1
    %1020 = vsyncpa %s1019, 1
    %1021 = vsyncpa [#allocation6], 1
    %1022 = vsyncpa [#allocation9], 1
    %1023 = vsyncpa [#allocation4], 1
    %s1024 = scalar_lea.sflag [#allocation4], 1
    %1025 = vsyncpa %s1024, 1

</llo_original>
